<compile_context>
chip_gen: v6e
topology: v6e:2x2x1
jax: 0.10.0
libtpu: 0.0.40
codegen_flags: <defaults>
</compile_context>

<pallas_src>
import functools

import jax
import jax.numpy as jnp
from jax import lax
from jax.experimental import pallas as pl
from jax.experimental.pallas import tpu as pltpu

NEG_SLOPE = 0.01   # nn.LeakyReLU default negative_slope
BN_EPS = 1e-5      # nn.BatchNorm2d default eps
GAP = 128          # zero halo before/after/between flattened images (lanes); must be >= W+1


def _leaky(v):
    return jnp.where(v >= 0, v, NEG_SLOPE * v)


def _resnet_block_kernel(x_hbm, w1_ref, b1_ref, w2_ref, b2_ref, wid_ref,
                         out_ref, xpad_ref, apad_ref, dma_sems,
                         *, W, HW, HW_pad, Cin, Cout, NB):
    SEG = HW_pad + GAP                       # per-image segment stride in the scratch
    LW = NB * HW_pad + (NB - 1) * GAP        # lane window spanning all NB images
    n = pl.program_id(0)

    # ---- DMA the NB images straight from HBM into the padded scratch interiors
    #      (no vld/vst round trip through vregs for x). ----
    copies = []
    for i in range(NB):
        dst = xpad_ref.at[:, GAP + i * SEG: GAP + i * SEG + HW_pad]
        cp = pltpu.make_async_copy(x_hbm.at[n * NB + i], dst, dma_sems.at[i])
        cp.start()
        copies.append(cp)

    # ---- zero ONLY the halo/gap strips (interiors are fully rewritten each step).
    #      Done every step: scratch is per-core under megacore sharding. ----
    for i in range(NB + 1):
        off = i * SEG
        xpad_ref[:, off:off + GAP] = jnp.zeros((Cin, GAP), xpad_ref.dtype)
        apad_ref[:, off:off + GAP] = jnp.zeros((Cout, GAP), apad_ref.dtype)

    # Hoisted edge-column masks over the whole lane window.  A +-1 lane shift of
    # the flat (row-major) image wraps column 0 / W-1 into the neighbouring row;
    # these masks zero that tap's contribution (indexed by the OUTPUT pixel's x).
    q = lax.broadcasted_iota(jnp.int32, (1, LW), 1) % SEG    # within-image flat idx
    col = q % W
    mask_l = (col > 0).astype(xpad_ref.dtype)        # kills x-1 reads at x == 0
    mask_r = (col < W - 1).astype(xpad_ref.dtype)    # kills x+1 reads at x == W-1

    def conv3x3(pad_ref, w_ref):
        # im2col along sublanes: the 9 shifted views are stacked to (9*C, LW)
        # and contracted in ONE bf16 matmul (K = 9*C), f32 accumulation in MXU.
        taps = []
        for dy in range(3):                           # fully unrolled at trace time
            for dx in range(3):
                s = (dy - 1) * W + (dx - 1)
                patch = pad_ref[:, GAP + s:GAP + s + LW]        # (C, LW) bf16
                if dx == 0:
                    patch = patch * mask_l
                elif dx == 2:
                    patch = patch * mask_r
                taps.append(patch)
        stacked = jnp.concatenate(taps, axis=0)                 # (9*C, LW) bf16
        return jnp.dot(w_ref[...], stacked,
                       preferred_element_type=jnp.float32)      # (Cout, LW) f32

    for cp in copies:                                 # x now resident in xpad
        cp.wait()

    # conv1 -> bn1 (scale folded into w1, shift added here) -> LeakyReLU
    a1 = _leaky(conv3x3(xpad_ref, w1_ref) + b1_ref[...])        # (Cout, LW) f32
    if HW_pad != HW:                                  # keep the lane pad tail zero
        a1 = a1 * (q < HW).astype(jnp.float32)
    a1 = a1.astype(apad_ref.dtype)
    for i in range(NB):                               # tile-aligned interior stores
        off = i * SEG
        apad_ref[:, GAP + off:GAP + off + HW_pad] = a1[:, off:off + HW_pad]

    # downsample (1x1 conv with bn2 scale folded): ONE matmul over the whole
    # window, re-read from the padded scratch so x is never live across conv1.
    idp = jnp.dot(wid_ref[...], xpad_ref[:, GAP:GAP + LW],
                  preferred_element_type=jnp.float32)           # (Cout, LW) f32

    # conv2 + downsample -> bn2 (folded) -> LeakyReLU
    y = _leaky(conv3x3(apad_ref, w2_ref) + idp + b2_ref[...])
    for i in range(NB):                               # lane-dense per-image stores
        off = i * SEG
        out_ref[i] = y[:, off:off + HW_pad].astype(out_ref.dtype)


def resnet_block(x_nchw, params, *, batch_block=8):
    """Fused ResnetBlock forward.  x_nchw: (N, Cin, H, W) float32.

    params use PyTorch layouts: convs OIHW (conv3x3/conv1x1, bias=False),
    BatchNorm as per-channel gamma/beta/running_mean/running_var (eval mode).
    """
    N, Cin, H, W = x_nchw.shape
    w1, w2 = params["w1"], params["w2"]
    Cout = w1.shape[0]
    HW = H * W
    assert W + 1 <= GAP, "image width must be <= 127"   # TODO(synk): band wider images

    HW_pad = ((HW + 127) // 128) * 128       # lane-dense stores need HW % 128 == 0
    NB = max(1, min(batch_block, N))         # images per grid step
    N_pad = ((N + NB - 1) // NB) * NB

    # Inference-mode BN folded to scale/shift; scale folded into conv weights.
    s1 = params["bn1_gamma"] * lax.rsqrt(params["bn1_var"] + BN_EPS)
    t1 = params["bn1_beta"] - params["bn1_mean"] * s1
    s2 = params["bn2_gamma"] * lax.rsqrt(params["bn2_var"] + BN_EPS)
    t2 = params["bn2_beta"] - params["bn2_mean"] * s2

    # OIHW -> (Cout, 9*C) with K laid out as (dy, dx, c); bf16 MXU operands.
    w1s = jnp.transpose(w1 * s1[:, None, None, None], (0, 2, 3, 1))
    w1s = w1s.reshape(Cout, 9 * Cin).astype(jnp.bfloat16)
    w2s = jnp.transpose(w2 * s2[:, None, None, None], (0, 2, 3, 1))
    w2s = w2s.reshape(Cout, 9 * Cout).astype(jnp.bfloat16)
    if "wid" in params:                      # conv1x1 downsample (Cin != Cout)
        wid = params["wid"][:, :, 0, 0]
    else:                                    # nn.Identity (Cin == Cout)
        wid = jnp.eye(Cout, dtype=jnp.float32)
    wid_s = (wid * s2[:, None]).astype(jnp.bfloat16)
    b1 = t1.reshape(Cout, 1).astype(jnp.float32)
    b2 = t2.reshape(Cout, 1).astype(jnp.float32)

    # NCHW -> (N, C, HW): free reshape, NO transpose.  bf16 halves HBM->VMEM DMA.
    x_flat = x_nchw.reshape(N, Cin, HW)
    if HW_pad != HW or N_pad != N:
        x_flat = jnp.pad(x_flat, ((0, N_pad - N), (0, 0), (0, HW_pad - HW)))
    x_flat = x_flat.astype(jnp.bfloat16)

    bufw = GAP + NB * (HW_pad + GAP)         # [gap][img0][gap][img1]...[gap]
    kernel = functools.partial(_resnet_block_kernel, W=W, HW=HW, HW_pad=HW_pad,
                               Cin=Cin, Cout=Cout, NB=NB)

    out_flat = pl.pallas_call(
        kernel,
        out_shape=jax.ShapeDtypeStruct((N_pad, Cout, HW_pad), jnp.float32),
        grid=(N_pad // NB,),
        in_specs=[
            pl.BlockSpec(memory_space=pl.ANY),                    # x stays in HBM
            pl.BlockSpec((Cout, 9 * Cin), lambda n: (0, 0)),      # w1 * bn1 scale
            pl.BlockSpec((Cout, 1), lambda n: (0, 0)),            # bn1 shift
            pl.BlockSpec((Cout, 9 * Cout), lambda n: (0, 0)),     # w2 * bn2 scale
            pl.BlockSpec((Cout, 1), lambda n: (0, 0)),            # bn2 shift
            pl.BlockSpec((Cout, Cin), lambda n: (0, 0)),          # downsample * bn2 scale
        ],
        out_specs=pl.BlockSpec((NB, Cout, HW_pad), lambda n: (n, 0, 0)),
        scratch_shapes=[
            pltpu.VMEM((Cin, bufw), jnp.bfloat16),   # halo'd flat x (bf16)
            pltpu.VMEM((Cout, bufw), jnp.bfloat16),  # halo'd flat conv1 activation
            pltpu.SemaphoreType.DMA((NB,)),          # per-image input DMA sems
        ],
        compiler_params=pltpu.CompilerParams(
            dimension_semantics=("parallel",)),      # batch blocks across TCs
    )(x_flat, w1s, b1, w2s, b2, wid_s)

    return out_flat[:N, :, :HW].reshape(N, Cout, H, W)


def resnet_block_reference(x, params):
    """Pure-JAX reference replicating the PyTorch forward (eval-mode BN, f32)."""
    dn = ("NCHW", "OIHW", "NCHW")

    def conv(v, w, pad):
        return lax.conv_general_dilated(v, w, (1, 1), ((pad, pad), (pad, pad)),
                                        dimension_numbers=dn)

    def bn(v, g, b, m, var):
        shp = (1, -1, 1, 1)
        return (v - m.reshape(shp)) * (g.reshape(shp)
                * lax.rsqrt(var.reshape(shp) + BN_EPS)) + b.reshape(shp)

    y = conv(x, params["w1"], 1)
    y = _leaky(bn(y, params["bn1_gamma"], params["bn1_beta"],
                  params["bn1_mean"], params["bn1_var"]))
    y = conv(y, params["w2"], 1)
    ds = conv(x, params["wid"], 0) if "wid" in params else x
    y = y + ds
    y = _leaky(bn(y, params["bn2_gamma"], params["bn2_beta"],
                  params["bn2_mean"], params["bn2_var"]))
    return y


if __name__ == "__main__":
    N, Cin, Cout, H, W = 2, 4, 8, 16, 16

    key = jax.random.PRNGKey(0)
    ks = jax.random.split(key, 12)
    params = {
        "w1":  jax.random.normal(ks[0], (Cout, Cin, 3, 3), jnp.float32) * 0.2,
        "w2":  jax.random.normal(ks[1], (Cout, Cout, 3, 3), jnp.float32) * 0.2,
        "wid": jax.random.normal(ks[2], (Cout, Cin, 1, 1), jnp.float32) * 0.2,
        "bn1_gamma": 1.0 + 0.1 * jax.random.normal(ks[3], (Cout,), jnp.float32),
        "bn1_beta":  0.1 * jax.random.normal(ks[4], (Cout,), jnp.float32),
        "bn1_mean":  0.1 * jax.random.normal(ks[5], (Cout,), jnp.float32),
        "bn1_var":   jax.random.uniform(ks[6], (Cout,), jnp.float32, 0.5, 1.5),
        "bn2_gamma": 1.0 + 0.1 * jax.random.normal(ks[7], (Cout,), jnp.float32),
        "bn2_beta":  0.1 * jax.random.normal(ks[8], (Cout,), jnp.float32),
        "bn2_mean":  0.1 * jax.random.normal(ks[9], (Cout,), jnp.float32),
        "bn2_var":   jax.random.uniform(ks[10], (Cout,), jnp.float32, 0.5, 1.5),
    }
    x = jax.random.normal(ks[11], (N, Cin, H, W), jnp.float32)

    y = jax.block_until_ready(resnet_block(x, params))
    y_ref = resnet_block_reference(x, params)

    assert y.shape == (N, Cout, H, W), y.shape
    max_err = jnp.max(jnp.abs(y - y_ref))
    rel_err = jnp.linalg.norm(y - y_ref) / jnp.linalg.norm(y_ref)
    # bf16 MXU operands -> tolerance loosened vs the f32 reference (per review).
    assert rel_err < 3e-2, f"relative error {rel_err}"
    assert jnp.allclose(y, y_ref, atol=2e-1, rtol=5e-2), f"max err {max_err}"

    print("KERNEL_OK")
</pallas_src>

<mosaic_0001>
module attributes {stable_mosaic.version = 11 : i64} {
  func.func @_resnet_block_kernel(%arg0: i32, %arg1: memref<2x4x256xbf16, #tpu.memory_space<any>>, %arg2: memref<8x36xbf16, #tpu.memory_space<vmem>>, %arg3: memref<8x1xf32, #tpu.memory_space<vmem>>, %arg4: memref<8x72xbf16, #tpu.memory_space<vmem>>, %arg5: memref<8x1xf32, #tpu.memory_space<vmem>>, %arg6: memref<8x4xbf16, #tpu.memory_space<vmem>>, %arg7: memref<2x8x256xf32, #tpu.memory_space<vmem>>, %arg8: memref<4x896xbf16, #tpu.memory_space<vmem>>, %arg9: memref<8x896xbf16, #tpu.memory_space<vmem>>, %arg10: memref<2x!tpu.dma_semaphore, #tpu.memory_space<semaphore_mem>>) attributes {dimension_semantics = [#tpu.dimension_semantics<parallel>], iteration_bounds = array<i64: 1>, scalar_prefetch = 0 : i64, scratch_operands = 3 : i64, tpu.core_type = #tpu.core_type<tc>, window_params = [{}, {pipeline_mode = #tpu.pipeline_mode<synchronous>, transform_indices = @transform_1, window_bounds = array<i64: 8, 36>}, {pipeline_mode = #tpu.pipeline_mode<synchronous>, transform_indices = @transform_2, window_bounds = array<i64: 8, 1>}, {pipeline_mode = #tpu.pipeline_mode<synchronous>, transform_indices = @transform_3, window_bounds = array<i64: 8, 72>}, {pipeline_mode = #tpu.pipeline_mode<synchronous>, transform_indices = @transform_4, window_bounds = array<i64: 8, 1>}, {pipeline_mode = #tpu.pipeline_mode<synchronous>, transform_indices = @transform_5, window_bounds = array<i64: 8, 4>}, {transform_indices = @transform_6, window_bounds = array<i64: 2, 8, 256>}]} {
    %c2_i32 = arith.constant 2 : i32
    %0 = arith.muli %arg0, %c2_i32 : i32
    %c0_i32 = arith.constant 0 : i32
    %1 = arith.addi %0, %c0_i32 : i32
    %c0_i32_0 = arith.constant 0 : i32
    %c0_i32_1 = arith.constant 0 : i32
    %c0_i32_2 = arith.constant 0 : i32
    %2 = tpu.memref_slice %arg1[%1, %c0_i32_1, %c0_i32_2] : memref<2x4x256xbf16, #tpu.memory_space<any>> -> memref<1x4x256xbf16, #tpu.memory_space<any>>
    %3 = tpu.memref_squeeze %2 : memref<1x4x256xbf16, #tpu.memory_space<any>> -> memref<4x256xbf16, #tpu.memory_space<any>>
    %c0_i32_3 = arith.constant 0 : i32
    %c128_i32 = arith.constant 128 : i32
    %4 = tpu.memref_slice %arg8[%c0_i32_3, %c128_i32] : memref<4x896xbf16, #tpu.memory_space<vmem>> -> memref<4x256xbf16, #tpu.memory_space<vmem>>
    %5 = tpu.memref_slice %arg10[%c0_i32_0] : memref<2x!tpu.dma_semaphore, #tpu.memory_space<semaphore_mem>> -> memref<1x!tpu.dma_semaphore, #tpu.memory_space<semaphore_mem>>
    %6 = tpu.memref_squeeze %5 : memref<1x!tpu.dma_semaphore, #tpu.memory_space<semaphore_mem>> -> memref<!tpu.dma_semaphore, #tpu.memory_space<semaphore_mem>>
    tpu.enqueue_dma source(%3 : memref<4x256xbf16, #tpu.memory_space<any>>) target(%4 : memref<4x256xbf16, #tpu.memory_space<vmem>>) target_semaphore(%6 : memref<!tpu.dma_semaphore, #tpu.memory_space<semaphore_mem>>)
    %c2_i32_4 = arith.constant 2 : i32
    %7 = arith.muli %arg0, %c2_i32_4 : i32
    %c1_i32 = arith.constant 1 : i32
    %8 = arith.addi %7, %c1_i32 : i32
    %c1_i32_5 = arith.constant 1 : i32
    %c0_i32_6 = arith.constant 0 : i32
    %c0_i32_7 = arith.constant 0 : i32
    %9 = tpu.memref_slice %arg1[%8, %c0_i32_6, %c0_i32_7] : memref<2x4x256xbf16, #tpu.memory_space<any>> -> memref<1x4x256xbf16, #tpu.memory_space<any>>
    %10 = tpu.memref_squeeze %9 : memref<1x4x256xbf16, #tpu.memory_space<any>> -> memref<4x256xbf16, #tpu.memory_space<any>>
    %c0_i32_8 = arith.constant 0 : i32
    %c512_i32 = arith.constant 512 : i32
    %11 = tpu.memref_slice %arg8[%c0_i32_8, %c512_i32] : memref<4x896xbf16, #tpu.memory_space<vmem>> -> memref<4x256xbf16, #tpu.memory_space<vmem>>
    %12 = tpu.memref_slice %arg10[%c1_i32_5] : memref<2x!tpu.dma_semaphore, #tpu.memory_space<semaphore_mem>> -> memref<1x!tpu.dma_semaphore, #tpu.memory_space<semaphore_mem>>
    %13 = tpu.memref_squeeze %12 : memref<1x!tpu.dma_semaphore, #tpu.memory_space<semaphore_mem>> -> memref<!tpu.dma_semaphore, #tpu.memory_space<semaphore_mem>>
    tpu.enqueue_dma source(%10 : memref<4x256xbf16, #tpu.memory_space<any>>) target(%11 : memref<4x256xbf16, #tpu.memory_space<vmem>>) target_semaphore(%13 : memref<!tpu.dma_semaphore, #tpu.memory_space<semaphore_mem>>)
    %cst = arith.constant 0.000000e+00 : bf16
    %14 = vector.broadcast %cst : bf16 to vector<4x128xbf16>
    %c0 = arith.constant 0 : index
    %c0_9 = arith.constant 0 : index
    %15 = vector.load %arg8[%c0, %c0_9] : memref<4x896xbf16, #tpu.memory_space<vmem>>, vector<4x128xbf16>
    tpu.vector_store %arg8[%c0, %c0_9], %14 {strides = array<i32>} : memref<4x896xbf16, #tpu.memory_space<vmem>>, vector<4x128xbf16>,
    %cst_10 = arith.constant 0.000000e+00 : bf16
    %16 = vector.broadcast %cst_10 : bf16 to vector<8x128xbf16>
    %c0_11 = arith.constant 0 : index
    %c0_12 = arith.constant 0 : index
    %17 = vector.load %arg9[%c0_11, %c0_12] : memref<8x896xbf16, #tpu.memory_space<vmem>>, vector<8x128xbf16>
    tpu.vector_store %arg9[%c0_11, %c0_12], %16 {strides = array<i32>} : memref<8x896xbf16, #tpu.memory_space<vmem>>, vector<8x128xbf16>,
    %cst_13 = arith.constant 0.000000e+00 : bf16
    %18 = vector.broadcast %cst_13 : bf16 to vector<4x128xbf16>
    %c0_14 = arith.constant 0 : index
    %c384 = arith.constant 384 : index
    %19 = vector.load %arg8[%c0_14, %c384] : memref<4x896xbf16, #tpu.memory_space<vmem>>, vector<4x128xbf16>
    tpu.vector_store %arg8[%c0_14, %c384], %18 {strides = array<i32>} : memref<4x896xbf16, #tpu.memory_space<vmem>>, vector<4x128xbf16>,
    %cst_15 = arith.constant 0.000000e+00 : bf16
    %20 = vector.broadcast %cst_15 : bf16 to vector<8x128xbf16>
    %c0_16 = arith.constant 0 : index
    %c384_17 = arith.constant 384 : index
    %21 = vector.load %arg9[%c0_16, %c384_17] : memref<8x896xbf16, #tpu.memory_space<vmem>>, vector<8x128xbf16>
    tpu.vector_store %arg9[%c0_16, %c384_17], %20 {strides = array<i32>} : memref<8x896xbf16, #tpu.memory_space<vmem>>, vector<8x128xbf16>,
    %cst_18 = arith.constant 0.000000e+00 : bf16
    %22 = vector.broadcast %cst_18 : bf16 to vector<4x128xbf16>
    %c0_19 = arith.constant 0 : index
    %c768 = arith.constant 768 : index
    %23 = vector.load %arg8[%c0_19, %c768] : memref<4x896xbf16, #tpu.memory_space<vmem>>, vector<4x128xbf16>
    tpu.vector_store %arg8[%c0_19, %c768], %22 {strides = array<i32>} : memref<4x896xbf16, #tpu.memory_space<vmem>>, vector<4x128xbf16>,
    %cst_20 = arith.constant 0.000000e+00 : bf16
    %24 = vector.broadcast %cst_20 : bf16 to vector<8x128xbf16>
    %c0_21 = arith.constant 0 : index
    %c768_22 = arith.constant 768 : index
    %25 = vector.load %arg9[%c0_21, %c768_22] : memref<8x896xbf16, #tpu.memory_space<vmem>>, vector<8x128xbf16>
    tpu.vector_store %arg9[%c0_21, %c768_22], %24 {strides = array<i32>} : memref<8x896xbf16, #tpu.memory_space<vmem>>, vector<8x128xbf16>,
    %26 = tpu.iota {dimensions = array<i32: 1>} : vector<1x640xi32>
    %c384_i32 = arith.constant 384 : i32
    %c0_i32_23 = arith.constant 0 : i32
    %27 = arith.cmpi eq, %c384_i32, %c0_i32_23 : i32
    %c1_i32_24 = arith.constant 1 : i32
    %28 = arith.select %27, %c1_i32_24, %c384_i32 : i32
    %29 = vector.broadcast %28 : i32 to vector<1x640xi32>
    %30 = arith.remsi %26, %29 : vector<1x640xi32>
    %c0_i32_25 = arith.constant 0 : i32
    %31 = vector.broadcast %c0_i32_25 : i32 to vector<1x640xi32>
    %32 = arith.cmpi ne, %30, %31 : vector<1x640xi32>
    %c0_i32_26 = arith.constant 0 : i32
    %33 = vector.broadcast %c0_i32_26 : i32 to vector<1x640xi32>
    %34 = arith.cmpi slt, %30, %33 : vector<1x640xi32>
    %c0_i32_27 = arith.constant 0 : i32
    %35 = arith.cmpi slt, %28, %c0_i32_27 : i32
    %36 = vector.broadcast %35 : i1 to vector<1x640xi1>
    %37 = vector.broadcast %36 : vector<1x640xi1> to vector<1x640xi1>
    %38 = arith.xori %34, %37 : vector<1x640xi1>
    %39 = arith.andi %38, %32 : vector<1x640xi1>
    %40 = vector.broadcast %28 : i32 to vector<1x640xi32>
    %41 = arith.addi %30, %40 : vector<1x640xi32>
    %42 = arith.select %39, %41, %30 : vector<1x640xi1>, vector<1x640xi32>
    %c16_i32 = arith.constant 16 : i32
    %c0_i32_28 = arith.constant 0 : i32
    %43 = arith.cmpi eq, %c16_i32, %c0_i32_28 : i32
    %c1_i32_29 = arith.constant 1 : i32
    %44 = arith.select %43, %c1_i32_29, %c16_i32 : i32
    %45 = vector.broadcast %44 : i32 to vector<1x640xi32>
    %46 = arith.remsi %42, %45 : vector<1x640xi32>
    %c0_i32_30 = arith.constant 0 : i32
    %47 = vector.broadcast %c0_i32_30 : i32 to vector<1x640xi32>
    %48 = arith.cmpi ne, %46, %47 : vector<1x640xi32>
    %c0_i32_31 = arith.constant 0 : i32
    %49 = vector.broadcast %c0_i32_31 : i32 to vector<1x640xi32>
    %50 = arith.cmpi slt, %46, %49 : vector<1x640xi32>
    %c0_i32_32 = arith.constant 0 : i32
    %51 = arith.cmpi slt, %44, %c0_i32_32 : i32
    %52 = vector.broadcast %51 : i1 to vector<1x640xi1>
    %53 = vector.broadcast %52 : vector<1x640xi1> to vector<1x640xi1>
    %54 = arith.xori %50, %53 : vector<1x640xi1>
    %55 = arith.andi %54, %48 : vector<1x640xi1>
    %56 = vector.broadcast %44 : i32 to vector<1x640xi32>
    %57 = arith.addi %46, %56 : vector<1x640xi32>
    %58 = arith.select %55, %57, %46 : vector<1x640xi1>, vector<1x640xi32>
    %c0_i32_33 = arith.constant 0 : i32
    %59 = vector.broadcast %c0_i32_33 : i32 to vector<1x640xi32>
    %60 = arith.cmpi sgt, %58, %59 : vector<1x640xi32>
    %61 = arith.extui %60 : vector<1x640xi1> to vector<1x640xi32>
    %62 = arith.sitofp %61 : vector<1x640xi32> to vector<1x640xf32>
    %63 = arith.truncf %62 : vector<1x640xf32> to vector<1x640xbf16>
    %c15_i32 = arith.constant 15 : i32
    %64 = vector.broadcast %c15_i32 : i32 to vector<1x640xi32>
    %65 = arith.cmpi slt, %58, %64 : vector<1x640xi32>
    %66 = arith.extui %65 : vector<1x640xi1> to vector<1x640xi32>
    %67 = arith.sitofp %66 : vector<1x640xi32> to vector<1x640xf32>
    %68 = arith.truncf %67 : vector<1x640xf32> to vector<1x640xbf16>
    %c0_i32_34 = arith.constant 0 : i32
    %c0_i32_35 = arith.constant 0 : i32
    %c0_i32_36 = arith.constant 0 : i32
    %69 = tpu.memref_slice %arg1[%1, %c0_i32_35, %c0_i32_36] : memref<2x4x256xbf16, #tpu.memory_space<any>> -> memref<1x4x256xbf16, #tpu.memory_space<any>>
    %70 = tpu.memref_squeeze %69 : memref<1x4x256xbf16, #tpu.memory_space<any>> -> memref<4x256xbf16, #tpu.memory_space<any>>
    %c0_i32_37 = arith.constant 0 : i32
    %c128_i32_38 = arith.constant 128 : i32
    %71 = tpu.memref_slice %arg8[%c0_i32_37, %c128_i32_38] : memref<4x896xbf16, #tpu.memory_space<vmem>> -> memref<4x256xbf16, #tpu.memory_space<vmem>>
    %72 = tpu.memref_slice %arg10[%c0_i32_34] : memref<2x!tpu.dma_semaphore, #tpu.memory_space<semaphore_mem>> -> memref<1x!tpu.dma_semaphore, #tpu.memory_space<semaphore_mem>>
    %73 = tpu.memref_squeeze %72 : memref<1x!tpu.dma_semaphore, #tpu.memory_space<semaphore_mem>> -> memref<!tpu.dma_semaphore, #tpu.memory_space<semaphore_mem>>
    tpu.wait_dma2 semaphore(%73 : memref<!tpu.dma_semaphore, #tpu.memory_space<semaphore_mem>>) src(%70 : memref<4x256xbf16, #tpu.memory_space<any>>) dst(%71 : memref<4x256xbf16, #tpu.memory_space<vmem>>)
    %c1_i32_39 = arith.constant 1 : i32
    %c0_i32_40 = arith.constant 0 : i32
    %c0_i32_41 = arith.constant 0 : i32
    %74 = tpu.memref_slice %arg1[%8, %c0_i32_40, %c0_i32_41] : memref<2x4x256xbf16, #tpu.memory_space<any>> -> memref<1x4x256xbf16, #tpu.memory_space<any>>
    %75 = tpu.memref_squeeze %74 : memref<1x4x256xbf16, #tpu.memory_space<any>> -> memref<4x256xbf16, #tpu.memory_space<any>>
    %c0_i32_42 = arith.constant 0 : i32
    %c512_i32_43 = arith.constant 512 : i32
    %76 = tpu.memref_slice %arg8[%c0_i32_42, %c512_i32_43] : memref<4x896xbf16, #tpu.memory_space<vmem>> -> memref<4x256xbf16, #tpu.memory_space<vmem>>
    %77 = tpu.memref_slice %arg10[%c1_i32_39] : memref<2x!tpu.dma_semaphore, #tpu.memory_space<semaphore_mem>> -> memref<1x!tpu.dma_semaphore, #tpu.memory_space<semaphore_mem>>
    %78 = tpu.memref_squeeze %77 : memref<1x!tpu.dma_semaphore, #tpu.memory_space<semaphore_mem>> -> memref<!tpu.dma_semaphore, #tpu.memory_space<semaphore_mem>>
    tpu.wait_dma2 semaphore(%78 : memref<!tpu.dma_semaphore, #tpu.memory_space<semaphore_mem>>) src(%75 : memref<4x256xbf16, #tpu.memory_space<any>>) dst(%76 : memref<4x256xbf16, #tpu.memory_space<vmem>>)
    %c0_44 = arith.constant 0 : index
    %c111 = arith.constant 111 : index
    %79 = vector.load %arg8[%c0_44, %c111] : memref<4x896xbf16, #tpu.memory_space<vmem>>, vector<4x640xbf16>
    %80 = vector.broadcast %63 : vector<1x640xbf16> to vector<4x640xbf16>
    %81 = arith.mulf %79, %80 : vector<4x640xbf16>
    %c0_45 = arith.constant 0 : index
    %c112 = arith.constant 112 : index
    %82 = vector.load %arg8[%c0_45, %c112] : memref<4x896xbf16, #tpu.memory_space<vmem>>, vector<4x640xbf16>
    %c0_46 = arith.constant 0 : index
    %c113 = arith.constant 113 : index
    %83 = vector.load %arg8[%c0_46, %c113] : memref<4x896xbf16, #tpu.memory_space<vmem>>, vector<4x640xbf16>
    %84 = vector.broadcast %68 : vector<1x640xbf16> to vector<4x640xbf16>
    %85 = arith.mulf %83, %84 : vector<4x640xbf16>
    %c0_47 = arith.constant 0 : index
    %c127 = arith.constant 127 : index
    %86 = vector.load %arg8[%c0_47, %c127] : memref<4x896xbf16, #tpu.memory_space<vmem>>, vector<4x640xbf16>
    %87 = vector.broadcast %63 : vector<1x640xbf16> to vector<4x640xbf16>
    %88 = arith.mulf %86, %87 : vector<4x640xbf16>
    %c0_48 = arith.constant 0 : index
    %c128 = arith.constant 128 : index
    %89 = vector.load %arg8[%c0_48, %c128] : memref<4x896xbf16, #tpu.memory_space<vmem>>, vector<4x640xbf16>
    %c0_49 = arith.constant 0 : index
    %c129 = arith.constant 129 : index
    %90 = vector.load %arg8[%c0_49, %c129] : memref<4x896xbf16, #tpu.memory_space<vmem>>, vector<4x640xbf16>
    %91 = vector.broadcast %68 : vector<1x640xbf16> to vector<4x640xbf16>
    %92 = arith.mulf %90, %91 : vector<4x640xbf16>
    %c0_50 = arith.constant 0 : index
    %c143 = arith.constant 143 : index
    %93 = vector.load %arg8[%c0_50, %c143] : memref<4x896xbf16, #tpu.memory_space<vmem>>, vector<4x640xbf16>
    %94 = vector.broadcast %63 : vector<1x640xbf16> to vector<4x640xbf16>
    %95 = arith.mulf %93, %94 : vector<4x640xbf16>
    %c0_51 = arith.constant 0 : index
    %c144 = arith.constant 144 : index
    %96 = vector.load %arg8[%c0_51, %c144] : memref<4x896xbf16, #tpu.memory_space<vmem>>, vector<4x640xbf16>
    %c0_52 = arith.constant 0 : index
    %c145 = arith.constant 145 : index
    %97 = vector.load %arg8[%c0_52, %c145] : memref<4x896xbf16, #tpu.memory_space<vmem>>, vector<4x640xbf16>
    %98 = vector.broadcast %68 : vector<1x640xbf16> to vector<4x640xbf16>
    %99 = arith.mulf %97, %98 : vector<4x640xbf16>
    %100 = tpu.concatenate %81, %82, %85, %88, %89, %92, %95, %96, %99 in 0 : vector<4x640xbf16>, vector<4x640xbf16>, vector<4x640xbf16>, vector<4x640xbf16>, vector<4x640xbf16>, vector<4x640xbf16>, vector<4x640xbf16>, vector<4x640xbf16>, vector<4x640xbf16> -> vector<36x640xbf16>
    %c0_53 = arith.constant 0 : index
    %c0_54 = arith.constant 0 : index
    %101 = vector.load %arg2[%c0_53, %c0_54] : memref<8x36xbf16, #tpu.memory_space<vmem>>, vector<8x36xbf16>
    %cst_55 = arith.constant dense<0.000000e+00> : vector<8x640xf32>
    %102 = tpu.matmul %101, %100, %cst_55 {dimension_numbers = #tpu.dot_dimension_numbers<[1], [0], [0], [1], [0, 0, 1, 1], [], []>} : vector<8x36xbf16>, vector<36x640xbf16>, vector<8x640xf32> -> vector<8x640xf32>
    %c0_56 = arith.constant 0 : index
    %c0_57 = arith.constant 0 : index
    %103 = vector.load %arg3[%c0_56, %c0_57] : memref<8x1xf32, #tpu.memory_space<vmem>>, vector<8x1xf32>
    %104 = vector.broadcast %103 : vector<8x1xf32> to vector<8x640xf32>
    %105 = arith.addf %102, %104 : vector<8x640xf32>
    %cst_58 = arith.constant 0.000000e+00 : f32
    %106 = vector.broadcast %cst_58 : f32 to vector<8x640xf32>
    %107 = arith.cmpf oge, %105, %106 : vector<8x640xf32>
    %cst_59 = arith.constant 0.00999999977 : f32
    %108 = vector.broadcast %cst_59 : f32 to vector<8x640xf32>
    %109 = arith.mulf %108, %105 : vector<8x640xf32>
    %110 = arith.select %107, %105, %109 : vector<8x640xi1>, vector<8x640xf32>
    %111 = arith.truncf %110 : vector<8x640xf32> to vector<8x640xbf16>
    %112 = vector.extract_strided_slice %111 {offsets = [0, 0], sizes = [8, 256], strides = [1, 1]} : vector<8x640xbf16> to vector<8x256xbf16>
    %c0_60 = arith.constant 0 : index
    %c128_61 = arith.constant 128 : index
    %113 = vector.load %arg9[%c0_60, %c128_61] : memref<8x896xbf16, #tpu.memory_space<vmem>>, vector<8x256xbf16>
    tpu.vector_store %arg9[%c0_60, %c128_61], %112 {strides = array<i32>} : memref<8x896xbf16, #tpu.memory_space<vmem>>, vector<8x256xbf16>,
    %114 = vector.extract_strided_slice %111 {offsets = [0, 384], sizes = [8, 256], strides = [1, 1]} : vector<8x640xbf16> to vector<8x256xbf16>
    %c0_62 = arith.constant 0 : index
    %c512 = arith.constant 512 : index
    %115 = vector.load %arg9[%c0_62, %c512] : memref<8x896xbf16, #tpu.memory_space<vmem>>, vector<8x256xbf16>
    tpu.vector_store %arg9[%c0_62, %c512], %114 {strides = array<i32>} : memref<8x896xbf16, #tpu.memory_space<vmem>>, vector<8x256xbf16>,
    %c0_63 = arith.constant 0 : index
    %c0_64 = arith.constant 0 : index
    %116 = vector.load %arg6[%c0_63, %c0_64] : memref<8x4xbf16, #tpu.memory_space<vmem>>, vector<8x4xbf16>
    %c0_65 = arith.constant 0 : index
    %c128_66 = arith.constant 128 : index
    %117 = vector.load %arg8[%c0_65, %c128_66] : memref<4x896xbf16, #tpu.memory_space<vmem>>, vector<4x640xbf16>
    %cst_67 = arith.constant dense<0.000000e+00> : vector<8x640xf32>
    %118 = tpu.matmul %116, %117, %cst_67 {dimension_numbers = #tpu.dot_dimension_numbers<[1], [0], [0], [1], [0, 0, 1, 1], [], []>} : vector<8x4xbf16>, vector<4x640xbf16>, vector<8x640xf32> -> vector<8x640xf32>
    %c0_68 = arith.constant 0 : index
    %c111_69 = arith.constant 111 : index
    %119 = vector.load %arg9[%c0_68, %c111_69] : memref<8x896xbf16, #tpu.memory_space<vmem>>, vector<8x640xbf16>
    %120 = vector.broadcast %63 : vector<1x640xbf16> to vector<8x640xbf16>
    %121 = arith.mulf %119, %120 : vector<8x640xbf16>
    %c0_70 = arith.constant 0 : index
    %c112_71 = arith.constant 112 : index
    %122 = vector.load %arg9[%c0_70, %c112_71] : memref<8x896xbf16, #tpu.memory_space<vmem>>, vector<8x640xbf16>
    %c0_72 = arith.constant 0 : index
    %c113_73 = arith.constant 113 : index
    %123 = vector.load %arg9[%c0_72, %c113_73] : memref<8x896xbf16, #tpu.memory_space<vmem>>, vector<8x640xbf16>
    %124 = vector.broadcast %68 : vector<1x640xbf16> to vector<8x640xbf16>
    %125 = arith.mulf %123, %124 : vector<8x640xbf16>
    %c0_74 = arith.constant 0 : index
    %c127_75 = arith.constant 127 : index
    %126 = vector.load %arg9[%c0_74, %c127_75] : memref<8x896xbf16, #tpu.memory_space<vmem>>, vector<8x640xbf16>
    %127 = vector.broadcast %63 : vector<1x640xbf16> to vector<8x640xbf16>
    %128 = arith.mulf %126, %127 : vector<8x640xbf16>
    %c0_76 = arith.constant 0 : index
    %c128_77 = arith.constant 128 : index
    %129 = vector.load %arg9[%c0_76, %c128_77] : memref<8x896xbf16, #tpu.memory_space<vmem>>, vector<8x640xbf16>
    %c0_78 = arith.constant 0 : index
    %c129_79 = arith.constant 129 : index
    %130 = vector.load %arg9[%c0_78, %c129_79] : memref<8x896xbf16, #tpu.memory_space<vmem>>, vector<8x640xbf16>
    %131 = vector.broadcast %68 : vector<1x640xbf16> to vector<8x640xbf16>
    %132 = arith.mulf %130, %131 : vector<8x640xbf16>
    %c0_80 = arith.constant 0 : index
    %c143_81 = arith.constant 143 : index
    %133 = vector.load %arg9[%c0_80, %c143_81] : memref<8x896xbf16, #tpu.memory_space<vmem>>, vector<8x640xbf16>
    %134 = vector.broadcast %63 : vector<1x640xbf16> to vector<8x640xbf16>
    %135 = arith.mulf %133, %134 : vector<8x640xbf16>
    %c0_82 = arith.constant 0 : index
    %c144_83 = arith.constant 144 : index
    %136 = vector.load %arg9[%c0_82, %c144_83] : memref<8x896xbf16, #tpu.memory_space<vmem>>, vector<8x640xbf16>
    %c0_84 = arith.constant 0 : index
    %c145_85 = arith.constant 145 : index
    %137 = vector.load %arg9[%c0_84, %c145_85] : memref<8x896xbf16, #tpu.memory_space<vmem>>, vector<8x640xbf16>
    %138 = vector.broadcast %68 : vector<1x640xbf16> to vector<8x640xbf16>
    %139 = arith.mulf %137, %138 : vector<8x640xbf16>
    %140 = tpu.concatenate %121, %122, %125, %128, %129, %132, %135, %136, %139 in 0 : vector<8x640xbf16>, vector<8x640xbf16>, vector<8x640xbf16>, vector<8x640xbf16>, vector<8x640xbf16>, vector<8x640xbf16>, vector<8x640xbf16>, vector<8x640xbf16>, vector<8x640xbf16> -> vector<72x640xbf16>
    %c0_86 = arith.constant 0 : index
    %c0_87 = arith.constant 0 : index
    %141 = vector.load %arg4[%c0_86, %c0_87] : memref<8x72xbf16, #tpu.memory_space<vmem>>, vector<8x72xbf16>
    %cst_88 = arith.constant dense<0.000000e+00> : vector<8x640xf32>
    %142 = tpu.matmul %141, %140, %cst_88 {dimension_numbers = #tpu.dot_dimension_numbers<[1], [0], [0], [1], [0, 0, 1, 1], [], []>} : vector<8x72xbf16>, vector<72x640xbf16>, vector<8x640xf32> -> vector<8x640xf32>
    %143 = arith.addf %142, %118 : vector<8x640xf32>
    %c0_89 = arith.constant 0 : index
    %c0_90 = arith.constant 0 : index
    %144 = vector.load %arg5[%c0_89, %c0_90] : memref<8x1xf32, #tpu.memory_space<vmem>>, vector<8x1xf32>
    %145 = vector.broadcast %144 : vector<8x1xf32> to vector<8x640xf32>
    %146 = arith.addf %143, %145 : vector<8x640xf32>
    %cst_91 = arith.constant 0.000000e+00 : f32
    %147 = vector.broadcast %cst_91 : f32 to vector<8x640xf32>
    %148 = arith.cmpf oge, %146, %147 : vector<8x640xf32>
    %cst_92 = arith.constant 0.00999999977 : f32
    %149 = vector.broadcast %cst_92 : f32 to vector<8x640xf32>
    %150 = arith.mulf %149, %146 : vector<8x640xf32>
    %151 = arith.select %148, %146, %150 : vector<8x640xi1>, vector<8x640xf32>
    %152 = vector.extract_strided_slice %151 {offsets = [0, 0], sizes = [8, 256], strides = [1, 1]} : vector<8x640xf32> to vector<8x256xf32>
    %c0_93 = arith.constant 0 : index
    %c0_94 = arith.constant 0 : index
    %c0_95 = arith.constant 0 : index
    %153 = vector.load %arg7[%c0_93, %c0_94, %c0_95] : memref<2x8x256xf32, #tpu.memory_space<vmem>>, vector<1x8x256xf32>
    %154 = vector.shape_cast %153 : vector<1x8x256xf32> to vector<8x256xf32>
    %155 = vector.shape_cast %152 : vector<8x256xf32> to vector<1x8x256xf32>
    tpu.vector_store %arg7[%c0_93, %c0_94, %c0_95], %155 {strides = array<i32>} : memref<2x8x256xf32, #tpu.memory_space<vmem>>, vector<1x8x256xf32>,
    %156 = vector.extract_strided_slice %151 {offsets = [0, 384], sizes = [8, 256], strides = [1, 1]} : vector<8x640xf32> to vector<8x256xf32>
    %c1 = arith.constant 1 : index
    %c0_96 = arith.constant 0 : index
    %c0_97 = arith.constant 0 : index
    %157 = vector.load %arg7[%c1, %c0_96, %c0_97] : memref<2x8x256xf32, #tpu.memory_space<vmem>>, vector<1x8x256xf32>
    %158 = vector.shape_cast %157 : vector<1x8x256xf32> to vector<8x256xf32>
    %159 = vector.shape_cast %156 : vector<8x256xf32> to vector<1x8x256xf32>
    tpu.vector_store %arg7[%c1, %c0_96, %c0_97], %159 {strides = array<i32>} : memref<2x8x256xf32, #tpu.memory_space<vmem>>, vector<1x8x256xf32>,
    return
  }
  func.func @transform_1(%arg0: i32) -> (i32, i32) {
    %c0_i32 = arith.constant 0 : i32
    %c0_i32_0 = arith.constant 0 : i32
    %c0_i32_1 = arith.constant 0 : i32
    return %c0_i32, %c0_i32_0 : i32, i32
  }
  func.func @transform_2(%arg0: i32) -> (i32, i32) {
    %c0_i32 = arith.constant 0 : i32
    %c0_i32_0 = arith.constant 0 : i32
    %c0_i32_1 = arith.constant 0 : i32
    return %c0_i32, %c0_i32_0 : i32, i32
  }
  func.func @transform_3(%arg0: i32) -> (i32, i32) {
    %c0_i32 = arith.constant 0 : i32
    %c0_i32_0 = arith.constant 0 : i32
    %c0_i32_1 = arith.constant 0 : i32
    return %c0_i32, %c0_i32_0 : i32, i32
  }
  func.func @transform_4(%arg0: i32) -> (i32, i32) {
    %c0_i32 = arith.constant 0 : i32
    %c0_i32_0 = arith.constant 0 : i32
    %c0_i32_1 = arith.constant 0 : i32
    return %c0_i32, %c0_i32_0 : i32, i32
  }
  func.func @transform_5(%arg0: i32) -> (i32, i32) {
    %c0_i32 = arith.constant 0 : i32
    %c0_i32_0 = arith.constant 0 : i32
    %c0_i32_1 = arith.constant 0 : i32
    return %c0_i32, %c0_i32_0 : i32, i32
  }
  func.func @transform_6(%arg0: i32) -> (i32, i32, i32) {
    %c0_i32 = arith.constant 0 : i32
    %c0_i32_0 = arith.constant 0 : i32
    %c0_i32_1 = arith.constant 0 : i32
    return %arg0, %c0_i32, %c0_i32_0 : i32, i32, i32
  }
}

</mosaic_0001>

<llo_original>
// kernel: tpu_custom_call.1
$region0: #{tpu_custom_call.1}
  #allocation0 [shape = 'u32[]', space=smem, size = 0x4, offset = 0x4, fixed_abs, tag = 'smem constant byte address 0x4 - core index']
  #allocation1 [shape = 'u32[144,128]{1,0:T(1,128)}', space=vmem, size = 0x12000, scoped, tag = 'internal scratch']
  #allocation2 [shape = 'bf16[4,896]{1,0:T(4,128)(2,1)}', space=vmem, size = 0x1c00, scoped, tag = 'scratch operand']
  #allocation3 [shape = 'bf16[8,896]{1,0:T(8,128)(2,1)}', space=vmem, size = 0x3800, scoped, tag = 'scratch operand']
  #allocation4 [shape = 's32[2]{0}', space=sflag, size = 0x8, scoped, tag = 'scratch operand']
  #allocation7 [shape = 's32[]', space=sflag, size = 0x4, offset = 0, fixed_abs, tag = 'sflag constant byte address 0x0 - dummy sync flag']
  #allocation8 [shape = 's32[]', space=sflag, size = 0x4, offset = 0, fixed_abs, tag = 'sflag constant byte address 0x0 - dummy sync flag']
  %s0 = inlined_call_operand.vmem [shape: bf16[2,4,256], index: 0, kind: input, shape index: {}]
  %s1 = inlined_call_operand.vmem [shape: bf16[8,36], index: 1, kind: input, shape index: {}]
  %s2 = inlined_call_operand.vmem [shape: f32[8,1], index: 2, kind: input, shape index: {}]
  %s3 = inlined_call_operand.vmem [shape: bf16[8,72], index: 3, kind: input, shape index: {}]
  %s4 = inlined_call_operand.vmem [shape: f32[8,1], index: 4, kind: input, shape index: {}]
  %s5 = inlined_call_operand.vmem [shape: bf16[8,4], index: 5, kind: input, shape index: {}]
  %s6 = inlined_call_operand.hbm [shape: f32[2,8,256], index: 6, kind: output, shape index: {}]
  %s7 = sld [smem:[#allocation0]]
  $region90: #{tpu_custom_call.1} parent=0
    _
  %s9 = ssub.s32 1, %s7
  %s10 = scalar_select 0, %s9, %s7
  $region1: #{tpu_custom_call.1} parent=0
    #allocation5 [shape = 'u8[16384]{0}', space=vmem, size = 0x4000, scoped, tag = 'output window, operand 0, single buffered']
    #allocation6 [shape = 's32[1]{0}', space=sflag, size = 0x4, scoped, tag = 'scoped memory for tpu_custom_call.1']
    %11 = vsyncpa [#allocation6], 0
    // Predicated region
    $region2: #{tpu_custom_call.1} parent=1 // pred_check
      _
    $region3: #{tpu_custom_call.1} parent=1 // pred_check_branch
      %13 = sbr.rel (0) target = $region5
    $region4: #{tpu_custom_call.1} parent=1 // pred_region
      _
    $region5: #{tpu_custom_call.1} parent=1 // pred_fallthru
      _
    // Predicated region
    $region6: #{tpu_custom_call.1} parent=1 // pred_check
      _
    $region7: #{tpu_custom_call.1} parent=1 // pred_check_branch
      %15 = sbr.rel (0) target = $region9
    $region8: #{tpu_custom_call.1} parent=1 // pred_region
      _
    $region9: #{tpu_custom_call.1} parent=1 // pred_fallthru
      _
    // Predicated region
    $region10: #{tpu_custom_call.1} parent=1 // pred_check
      _
    $region11: #{tpu_custom_call.1} parent=1 // pred_check_branch
      %17 = sbr.rel (0) target = $region13
    $region12: #{tpu_custom_call.1} parent=1 // pred_region
      _
    $region13: #{tpu_custom_call.1} parent=1 // pred_fallthru
      _
    // Predicated region
    $region14: #{tpu_custom_call.1} parent=1 // pred_check
      _
    $region15: #{tpu_custom_call.1} parent=1 // pred_check_branch
      %19 = sbr.rel (0) target = $region17
    $region16: #{tpu_custom_call.1} parent=1 // pred_region
      _
    $region17: #{tpu_custom_call.1} parent=1 // pred_fallthru
      _
    // Predicated region
    $region18: #{tpu_custom_call.1} parent=1 // pred_check
      _
    $region19: #{tpu_custom_call.1} parent=1 // pred_check_branch
      %21 = sbr.rel (0) target = $region21
    $region20: #{tpu_custom_call.1} parent=1 // pred_region
      _
    $region21: #{tpu_custom_call.1} parent=1 // pred_fallthru
      _
    %s23 = smul.u32 0, 2
    %s24 = smul.u32 %s23, 2
    %s25 = smul.addr %s24, 2
    %s26 = scalar_lea.vmem %s0, %s25
    %s27 = scalar_lea.vmem [#allocation2], 2
    %p29 = scmp.lt.u32.totalorder 4, 8
    %p30 = pneg %p29
    // Predicated region
    $region22: #{tpu_custom_call.1} parent=1 // pred_check
      _
    $region23: #{tpu_custom_call.1} parent=1 // pred_check_branch
      %32 = sbr.rel (%p29) target = $region25
    $region24: #{tpu_custom_call.1} parent=1 // pred_region
      %s48 = sand.u32 4, 7
      %p49 = scmp.eq.s32.totalorder %s48, 0
      %p50 = pneg %p49
      // Predicated region
      $region37: #{tpu_custom_call.1} parent=24 // pred_check
        _
      $region38: #{tpu_custom_call.1} parent=24 // pred_check_branch
        %52 = sbr.rel (%p49) target = $region40
      $region39: #{tpu_custom_call.1} parent=24 // pred_region
        %s53 = sand.u32 4, 7
        %s54 = ssub.s32 4, %s53
        %s55 = scalar_lea.vmem %s26, %s54
        %s56 = ssub.s32 4, %s53
        %s57 = scalar_lea.vmem %s27, %s56 [#allocation2]
        %s58 = sshll.u32 1, %s53
        %s59 = ssub.s32 %s58, 1
        loop: start=0, step=1, limit=1
        $region41: #{tpu_custom_call.1} parent=39 // loop_pre_header
          _
        $region42: #{tpu_custom_call.1} parent=39 // loop_header
          %s61 = sphi 0, %s65
          %p62 = scmp.ge.s32.totalorder %s61, 1
          %s66 = sphi %s55, %s55
          %s67 = sphi %s57, %s57
        $region43: #{tpu_custom_call.1} parent=39 // loop_header_branch
          %64 = sbr.rel (%p62) target = $region47
        $region44: #{tpu_custom_call.1} parent=39 // loop_body
          %v68 = vld [vmem:[%s66] sm:%s59]
          %69 = vst [vmem:[%s67] sm:%s59] %v68
        $region45: #{tpu_custom_call.1} parent=39 // loop_footer
          %s65 = sadd.s32 1, %s61
        $region46: #{tpu_custom_call.1} parent=39 // loop_footer_branch
          %60 = sbr.rel target = $region42
        $region47: #{tpu_custom_call.1} parent=39 // loop_exit
          _
      $region40: #{tpu_custom_call.1} parent=24 // pred_fallthru
        _
    $region25: #{tpu_custom_call.1} parent=1 // pred_fallthru
      _
    // Predicated region
    $region26: #{tpu_custom_call.1} parent=1 // pred_check
      %p33 = pneg %p29
    $region27: #{tpu_custom_call.1} parent=1 // pred_check_branch
      %35 = sbr.rel (%p33) target = $region29
    $region28: #{tpu_custom_call.1} parent=1 // pred_region
      %s36 = sshll.u32 1, 4
      %s37 = ssub.s32 %s36, 1
      loop: start=0, step=1, limit=1
      $region30: #{tpu_custom_call.1} parent=28 // loop_pre_header
        _
      $region31: #{tpu_custom_call.1} parent=28 // loop_header
        %s39 = sphi 0, %s43
        %p40 = scmp.ge.s32.totalorder %s39, 1
        %s44 = sphi %s26, %s26
        %s45 = sphi %s27, %s27
      $region32: #{tpu_custom_call.1} parent=28 // loop_header_branch
        %42 = sbr.rel (%p40) target = $region36
      $region33: #{tpu_custom_call.1} parent=28 // loop_body
        %v46 = vld [vmem:[%s44] sm:%s37]
        %47 = vst [vmem:[%s45] sm:%s37] %v46
      $region34: #{tpu_custom_call.1} parent=28 // loop_footer
        %s43 = sadd.s32 1, %s39
      $region35: #{tpu_custom_call.1} parent=28 // loop_footer_branch
        %38 = sbr.rel target = $region31
      $region36: #{tpu_custom_call.1} parent=28 // loop_exit
        _
    $region29: #{tpu_custom_call.1} parent=1 // pred_fallthru
      _
    // Predicated region
    $region48: #{tpu_custom_call.1} parent=1 // pred_check
      _
    $region49: #{tpu_custom_call.1} parent=1 // pred_check_branch
      %72 = sbr.rel (0) target = $region51
    $region50: #{tpu_custom_call.1} parent=1 // pred_region
      %73 = vsyncadd [#allocation4], 64
    $region51: #{tpu_custom_call.1} parent=1 // pred_fallthru
      _
    %s74 = sadd.s32 %s23, 1
    %s75 = smul.u32 %s74, 2
    %s76 = smul.addr %s75, 2
    %s77 = scalar_lea.vmem %s0, %s76
    %s78 = scalar_lea.vmem [#allocation2], 8
    %s79 = scalar_lea.sflag [#allocation4], 1
    %p81 = scmp.lt.u32.totalorder 4, 8
    %p82 = pneg %p81
    // Predicated region
    $region52: #{tpu_custom_call.1} parent=1 // pred_check
      _
    $region53: #{tpu_custom_call.1} parent=1 // pred_check_branch
      %84 = sbr.rel (%p81) target = $region55
    $region54: #{tpu_custom_call.1} parent=1 // pred_region
      %s100 = sand.u32 4, 7
      %p101 = scmp.eq.s32.totalorder %s100, 0
      %p102 = pneg %p101
      // Predicated region
      $region67: #{tpu_custom_call.1} parent=54 // pred_check
        _
      $region68: #{tpu_custom_call.1} parent=54 // pred_check_branch
        %104 = sbr.rel (%p101) target = $region70
      $region69: #{tpu_custom_call.1} parent=54 // pred_region
        %s105 = sand.u32 4, 7
        %s106 = ssub.s32 4, %s105
        %s107 = scalar_lea.vmem %s77, %s106
        %s108 = ssub.s32 4, %s105
        %s109 = scalar_lea.vmem %s78, %s108 [#allocation2]
        %s110 = sshll.u32 1, %s105
        %s111 = ssub.s32 %s110, 1
        loop: start=0, step=1, limit=1
        $region71: #{tpu_custom_call.1} parent=69 // loop_pre_header
          _
        $region72: #{tpu_custom_call.1} parent=69 // loop_header
          %s113 = sphi 0, %s117
          %p114 = scmp.ge.s32.totalorder %s113, 1
          %s118 = sphi %s107, %s107
          %s119 = sphi %s109, %s109
        $region73: #{tpu_custom_call.1} parent=69 // loop_header_branch
          %116 = sbr.rel (%p114) target = $region77
        $region74: #{tpu_custom_call.1} parent=69 // loop_body
          %v120 = vld [vmem:[%s118] sm:%s111]
          %121 = vst [vmem:[%s119] sm:%s111] %v120
        $region75: #{tpu_custom_call.1} parent=69 // loop_footer
          %s117 = sadd.s32 1, %s113
        $region76: #{tpu_custom_call.1} parent=69 // loop_footer_branch
          %112 = sbr.rel target = $region72
        $region77: #{tpu_custom_call.1} parent=69 // loop_exit
          _
      $region70: #{tpu_custom_call.1} parent=54 // pred_fallthru
        _
    $region55: #{tpu_custom_call.1} parent=1 // pred_fallthru
      _
    // Predicated region
    $region56: #{tpu_custom_call.1} parent=1 // pred_check
      %p85 = pneg %p81
    $region57: #{tpu_custom_call.1} parent=1 // pred_check_branch
      %87 = sbr.rel (%p85) target = $region59
    $region58: #{tpu_custom_call.1} parent=1 // pred_region
      %s88 = sshll.u32 1, 4
      %s89 = ssub.s32 %s88, 1
      loop: start=0, step=1, limit=1
      $region60: #{tpu_custom_call.1} parent=58 // loop_pre_header
        _
      $region61: #{tpu_custom_call.1} parent=58 // loop_header
        %s91 = sphi 0, %s95
        %p92 = scmp.ge.s32.totalorder %s91, 1
        %s96 = sphi %s77, %s77
        %s97 = sphi %s78, %s78
      $region62: #{tpu_custom_call.1} parent=58 // loop_header_branch
        %94 = sbr.rel (%p92) target = $region66
      $region63: #{tpu_custom_call.1} parent=58 // loop_body
        %v98 = vld [vmem:[%s96] sm:%s89]
        %99 = vst [vmem:[%s97] sm:%s89] %v98
      $region64: #{tpu_custom_call.1} parent=58 // loop_footer
        %s95 = sadd.s32 1, %s91
      $region65: #{tpu_custom_call.1} parent=58 // loop_footer_branch
        %90 = sbr.rel target = $region61
      $region66: #{tpu_custom_call.1} parent=58 // loop_exit
        _
    $region59: #{tpu_custom_call.1} parent=1 // pred_fallthru
      _
    // Predicated region
    $region78: #{tpu_custom_call.1} parent=1 // pred_check
      _
    $region79: #{tpu_custom_call.1} parent=1 // pred_check_branch
      %124 = sbr.rel (0) target = $region81
    $region80: #{tpu_custom_call.1} parent=1 // pred_region
      %125 = vsyncadd %s79, 64
    $region81: #{tpu_custom_call.1} parent=1 // pred_fallthru
      _
    %126 = vst [vmem:[#allocation2] sm:$0x3] 0
    %127 = vst [vmem:[#allocation3] sm:$0xf] 0
    %128 = vst [vmem:[#allocation2 + $0x6] sm:$0x3] 0
    %129 = vst [vmem:[#allocation3 + $0xc] sm:$0xf] 0
    %130 = vst [vmem:[#allocation2 + $0xc] sm:$0x3] 0
    %131 = vst [vmem:[#allocation3 + $0x18] sm:$0xf] 0
    %v132 = vlaneseq
    %v133 = vand.u32 %v132, 127
    %v134 = vadd.s32 %v133, 128
    %v135 = vadd.s32 %v133, 256
    %v136 = vadd.s32 %v133, 384
    %v137 = vadd.s32 %v133, 512
    %vm138 = vcmp.lt.s32.totalorder %v133, 0
    %v139 = vsub.s32 0, %v133
    %v140 = vsel %vm138, %v139, %v133
    %v141 = vmul.u32.u64.compose %v140, 2863311531
    %v142 = vextract.low.u32 %v141
    %v143 = vextract.high.u32 %v141
    %v144 = vshrl.u32 %v143, 8
    %v145 = vmul.u32 %v144, 384
    %v146 = vsub.s32 %v140, %v145
    %v147 = vsub.s32 0, %v146
    %v148 = vsel %vm138, %v147, %v146
    %vm149 = vcmp.lt.s32.totalorder %v134, 0
    %v150 = vsub.s32 0, %v134
    %v151 = vsel %vm149, %v150, %v134
    %v152 = vmul.u32.u64.compose %v151, 2863311531
    %v153 = vextract.low.u32 %v152
    %v154 = vextract.high.u32 %v152
    %v155 = vshrl.u32 %v154, 8
    %v156 = vmul.u32 %v155, 384
    %v157 = vsub.s32 %v151, %v156
    %v158 = vsub.s32 0, %v157
    %v159 = vsel %vm149, %v158, %v157
    %vm160 = vcmp.lt.s32.totalorder %v135, 0
    %v161 = vsub.s32 0, %v135
    %v162 = vsel %vm160, %v161, %v135
    %v163 = vmul.u32.u64.compose %v162, 2863311531
    %v164 = vextract.low.u32 %v163
    %v165 = vextract.high.u32 %v163
    %v166 = vshrl.u32 %v165, 8
    %v167 = vmul.u32 %v166, 384
    %v168 = vsub.s32 %v162, %v167
    %v169 = vsub.s32 0, %v168
    %v170 = vsel %vm160, %v169, %v168
    %vm171 = vcmp.lt.s32.totalorder %v136, 0
    %v172 = vsub.s32 0, %v136
    %v173 = vsel %vm171, %v172, %v136
    %v174 = vmul.u32.u64.compose %v173, 2863311531
    %v175 = vextract.low.u32 %v174
    %v176 = vextract.high.u32 %v174
    %v177 = vshrl.u32 %v176, 8
    %v178 = vmul.u32 %v177, 384
    %v179 = vsub.s32 %v173, %v178
    %v180 = vsub.s32 0, %v179
    %v181 = vsel %vm171, %v180, %v179
    %vm182 = vcmp.lt.s32.totalorder %v137, 0
    %v183 = vsub.s32 0, %v137
    %v184 = vsel %vm182, %v183, %v137
    %v185 = vmul.u32.u64.compose %v184, 2863311531
    %v186 = vextract.low.u32 %v185
    %v187 = vextract.high.u32 %v185
    %v188 = vshrl.u32 %v187, 8
    %v189 = vmul.u32 %v188, 384
    %v190 = vsub.s32 %v184, %v189
    %v191 = vsub.s32 0, %v190
    %v192 = vsel %vm182, %v191, %v190
    %vm193 = vcmp.ne.s32.totalorder %v148, 0
    %vm194 = vcmp.ne.s32.totalorder %v159, 0
    %vm195 = vcmp.ne.s32.totalorder %v170, 0
    %vm196 = vcmp.ne.s32.totalorder %v181, 0
    %vm197 = vcmp.ne.s32.totalorder %v192, 0
    %vm198 = vcmp.lt.s32.totalorder %v148, 0
    %vm199 = vcmp.lt.s32.totalorder %v159, 0
    %vm200 = vcmp.lt.s32.totalorder %v170, 0
    %vm201 = vcmp.lt.s32.totalorder %v181, 0
    %vm202 = vcmp.lt.s32.totalorder %v192, 0
    %vm203 = vmand %vm198, %vm193
    %vm204 = vmand %vm199, %vm194
    %vm205 = vmand %vm200, %vm195
    %vm206 = vmand %vm201, %vm196
    %vm207 = vmand %vm202, %vm197
    %v208 = vadd.s32 %v148, 384
    %v209 = vadd.s32 %v159, 384
    %v210 = vadd.s32 %v170, 384
    %v211 = vadd.s32 %v181, 384
    %v212 = vadd.s32 %v192, 384
    %v213 = vsel %vm203, %v208, %v148
    %v214 = vsel %vm204, %v209, %v159
    %v215 = vsel %vm205, %v210, %v170
    %v216 = vsel %vm206, %v211, %v181
    %v217 = vsel %vm207, %v212, %v192
    %vm218 = vcmp.lt.s32.totalorder %v213, 0
    %v219 = vsub.s32 0, %v213
    %v220 = vsel %vm218, %v219, %v213
    %v221 = vshrl.u32 %v220, 4
    %v222 = vand.u32 %v220, 15
    %v223 = vsub.s32 0, %v222
    %v224 = vsel %vm218, %v223, %v222
    %vm225 = vcmp.lt.s32.totalorder %v214, 0
    %v226 = vsub.s32 0, %v214
    %v227 = vsel %vm225, %v226, %v214
    %v228 = vshrl.u32 %v227, 4
    %v229 = vand.u32 %v227, 15
    %v230 = vsub.s32 0, %v229
    %v231 = vsel %vm225, %v230, %v229
    %vm232 = vcmp.lt.s32.totalorder %v215, 0
    %v233 = vsub.s32 0, %v215
    %v234 = vsel %vm232, %v233, %v215
    %v235 = vshrl.u32 %v234, 4
    %v236 = vand.u32 %v234, 15
    %v237 = vsub.s32 0, %v236
    %v238 = vsel %vm232, %v237, %v236
    %vm239 = vcmp.lt.s32.totalorder %v216, 0
    %v240 = vsub.s32 0, %v216
    %v241 = vsel %vm239, %v240, %v216
    %v242 = vshrl.u32 %v241, 4
    %v243 = vand.u32 %v241, 15
    %v244 = vsub.s32 0, %v243
    %v245 = vsel %vm239, %v244, %v243
    %vm246 = vcmp.lt.s32.totalorder %v217, 0
    %v247 = vsub.s32 0, %v217
    %v248 = vsel %vm246, %v247, %v217
    %v249 = vshrl.u32 %v248, 4
    %v250 = vand.u32 %v248, 15
    %v251 = vsub.s32 0, %v250
    %v252 = vsel %vm246, %v251, %v250
    %vm253 = vcmp.ne.s32.totalorder %v224, 0
    %vm254 = vcmp.ne.s32.totalorder %v231, 0
    %vm255 = vcmp.ne.s32.totalorder %v238, 0
    %vm256 = vcmp.ne.s32.totalorder %v245, 0
    %vm257 = vcmp.ne.s32.totalorder %v252, 0
    %vm258 = vcmp.lt.s32.totalorder %v224, 0
    %vm259 = vcmp.lt.s32.totalorder %v231, 0
    %vm260 = vcmp.lt.s32.totalorder %v238, 0
    %vm261 = vcmp.lt.s32.totalorder %v245, 0
    %vm262 = vcmp.lt.s32.totalorder %v252, 0
    %vm263 = vmand %vm258, %vm253
    %vm264 = vmand %vm259, %vm254
    %vm265 = vmand %vm260, %vm255
    %vm266 = vmand %vm261, %vm256
    %vm267 = vmand %vm262, %vm257
    %v268 = vadd.s32 %v224, 16
    %v269 = vadd.s32 %v231, 16
    %v270 = vadd.s32 %v238, 16
    %v271 = vadd.s32 %v245, 16
    %v272 = vadd.s32 %v252, 16
    %v273 = vsel %vm263, %v268, %v224
    %v274 = vsel %vm264, %v269, %v231
    %v275 = vsel %vm265, %v270, %v238
    %v276 = vsel %vm266, %v271, %v245
    %v277 = vsel %vm267, %v272, %v252
    %vm278 = vcmp.gt.s32.totalorder %v273, 0
    %vm279 = vcmp.gt.s32.totalorder %v274, 0
    %vm280 = vcmp.gt.s32.totalorder %v275, 0
    %vm281 = vcmp.gt.s32.totalorder %v276, 0
    %vm282 = vcmp.gt.s32.totalorder %v277, 0
    %v283 = vsel %vm278, 1, 0
    %v284 = vsel %vm279, 1, 0
    %v285 = vsel %vm280, 1, 0
    %v286 = vsel %vm281, 1, 0
    %v287 = vsel %vm282, 1, 0
    %v288 = vcvt.s32.f32 %v283
    %v289 = vcvt.s32.f32 %v284
    %v290 = vcvt.s32.f32 %v285
    %v291 = vcvt.s32.f32 %v286
    %v292 = vcvt.s32.f32 %v287
    %v293 = vpack.c.bf16 %v288, %v288
    %v294 = vpack.c.bf16 %v289, %v289
    %v295 = vpack.c.bf16 %v290, %v290
    %v296 = vpack.c.bf16 %v291, %v291
    %v297 = vpack.c.bf16 %v292, %v292
    %vm298 = vcmp.lt.s32.totalorder %v273, 15
    %vm299 = vcmp.lt.s32.totalorder %v274, 15
    %vm300 = vcmp.lt.s32.totalorder %v275, 15
    %vm301 = vcmp.lt.s32.totalorder %v276, 15
    %vm302 = vcmp.lt.s32.totalorder %v277, 15
    %v303 = vsel %vm298, 1, 0
    %v304 = vsel %vm299, 1, 0
    %v305 = vsel %vm300, 1, 0
    %v306 = vsel %vm301, 1, 0
    %v307 = vsel %vm302, 1, 0
    %v308 = vcvt.s32.f32 %v303
    %v309 = vcvt.s32.f32 %v304
    %v310 = vcvt.s32.f32 %v305
    %v311 = vcvt.s32.f32 %v306
    %v312 = vcvt.s32.f32 %v307
    %v313 = vpack.c.bf16 %v308, %v308
    %v314 = vpack.c.bf16 %v309, %v309
    %v315 = vpack.c.bf16 %v310, %v310
    %v316 = vpack.c.bf16 %v311, %v311
    %v317 = vpack.c.bf16 %v312, %v312
    %s318 = smul.u32 2, 1
    %s319 = smul.u32 %s318, 2
    %s320 = sshll.u32 %s319, 4
    %321 = dma.done [#allocation4], %s320
    %s322 = sshll.u32 %s319, 4
    %323 = dma.done %s79, %s322
    %v324 = vld [vmem:[#allocation2] sm:$0xff]
    %v325 = vld [vmem:[#allocation2 + $0x8] sm:$0xf]
    %v331 = vcombine.low %v293, %v294
    %v332 = vcombine.low %v295, %v296
    %v334 = vunpack.c.l.s4 1983009808
    %v335 = vunpack.c.0.s8 %v334
    %v336 = vlaneseq
    %v337 = vshrl.u32 %v336, 7
    %v338 = vsub.s32 %v335, %v337
    %v339 = vrot.slane %v331, %v338
    %v341 = vunpack.c.l.s4 1983009808
    %v342 = vunpack.c.0.s8 %v341
    %v343 = vlaneseq
    %v344 = vshrl.u32 %v343, 7
    %v345 = vsub.s32 %v342, %v344
    %v346 = vrot.slane %v332, %v345
    %v347 = vcombine.low %v339, %v346
    %v349 = vunpack.c.l.s4 1983009808
    %v350 = vunpack.c.0.s8 %v349
    %v351 = vlaneseq
    %v352 = vshrl.u32 %v351, 7
    %v353 = vsub.s32 %v350, %v352
    %v354 = vrot.slane %v297, %v353
    %355 = vrot.lane.b32.xlu0 %v347, 111
    %v356 = vpop.permute.xlu0 %355
    %357 = vrot.lane.b32.xlu0 %v354, 111
    %v358 = vpop.permute.xlu0 %357
    %v359 = vrot.slane %v356, 6
    %v360 = vrot.slane %v358, 6
    %vm361 = vcmask 908288
    %v362 = vsel %vm361, %v359, %v356
    %vm363 = vcmask 1041408
    %v364 = vsel %vm363, %v359, %v360
    %v365 = vsel %vm361, %v364, %v358
    %v368 = vmul.bf16 %v324, %v362
    %v369 = vmul.bf16 %v325, %v365
    %v375 = vcombine.low %v313, %v314
    %v376 = vcombine.low %v315, %v316
    %v378 = vunpack.c.l.s4 1983009808
    %v379 = vunpack.c.0.s8 %v378
    %v380 = vlaneseq
    %v381 = vshrl.u32 %v380, 7
    %v382 = vsub.s32 %v379, %v381
    %v383 = vrot.slane %v375, %v382
    %v385 = vunpack.c.l.s4 1983009808
    %v386 = vunpack.c.0.s8 %v385
    %v387 = vlaneseq
    %v388 = vshrl.u32 %v387, 7
    %v389 = vsub.s32 %v386, %v388
    %v390 = vrot.slane %v376, %v389
    %v391 = vcombine.low %v383, %v390
    %v393 = vunpack.c.l.s4 1983009808
    %v394 = vunpack.c.0.s8 %v393
    %v395 = vlaneseq
    %v396 = vshrl.u32 %v395, 7
    %v397 = vsub.s32 %v394, %v396
    %v398 = vrot.slane %v317, %v397
    %399 = vrot.lane.b32.xlu0 %v391, 113
    %v400 = vpop.permute.xlu0 %399
    %401 = vrot.lane.b32.xlu0 %v398, 113
    %v402 = vpop.permute.xlu0 %401
    %v403 = vrot.slane %v400, 6
    %v404 = vrot.slane %v402, 6
    %vm405 = vcmask 924672
    %v406 = vsel %vm405, %v403, %v400
    %v407 = vsel %vm363, %v403, %v404
    %v408 = vsel %vm405, %v407, %v402
    %v411 = vmul.bf16 %v324, %v406
    %v412 = vmul.bf16 %v325, %v408
    %413 = vrot.lane.b32.xlu0 %v347, 127
    %v414 = vpop.permute.xlu0 %413
    %415 = vrot.lane.b32.xlu0 %v354, 127
    %v416 = vpop.permute.xlu0 %415
    %v417 = vrot.slane %v414, 6
    %v418 = vrot.slane %v416, 6
    %vm419 = vcmask 1039360
    %v420 = vsel %vm419, %v417, %v414
    %v421 = vsel %vm363, %v417, %v418
    %v422 = vsel %vm419, %v421, %v416
    %v425 = vmul.bf16 %v324, %v420
    %v426 = vmul.bf16 %v325, %v422
    %v427 = vld [vmem:[#allocation2 + $0x2] sm:$0xff]
    %v428 = vld [vmem:[#allocation2 + $0xa] sm:$0x3]
    %v429 = vld [vmem:[#allocation2 + $0x2] sm:$0xff]
    %v430 = vld [vmem:[#allocation2 + $0xa] sm:$0xf]
    %431 = vrot.lane.b32.xlu0 %v391, 1
    %v432 = vpop.permute.xlu0 %431
    %433 = vrot.lane.b32.xlu0 %v398, 1
    %v434 = vpop.permute.xlu0 %433
    %v435 = vrot.slane %v432, 6
    %v436 = vrot.slane %v434, 6
    %vm437 = vcmask 7168
    %v438 = vsel %vm437, %v435, %v432
    %v439 = vsel %vm363, %v435, %v436
    %v440 = vsel %vm437, %v439, %v434
    %v443 = vmul.bf16 %v429, %v438
    %v444 = vmul.bf16 %v430, %v440
    %445 = vrot.lane.b32.xlu0 %v347, 15
    %v446 = vpop.permute.xlu0 %445
    %447 = vrot.lane.b32.xlu0 %v354, 15
    %v448 = vpop.permute.xlu0 %447
    %v449 = vrot.slane %v446, 6
    %v450 = vrot.slane %v448, 6
    %vm451 = vcmask 121856
    %v452 = vsel %vm451, %v449, %v446
    %v453 = vsel %vm363, %v449, %v450
    %v454 = vsel %vm451, %v453, %v448
    %v457 = vmul.bf16 %v429, %v452
    %v458 = vmul.bf16 %v430, %v454
    %459 = vrot.lane.b32.xlu0 %v391, 17
    %v460 = vpop.permute.xlu0 %459
    %461 = vrot.lane.b32.xlu0 %v398, 17
    %v462 = vpop.permute.xlu0 %461
    %v463 = vrot.slane %v460, 6
    %v464 = vrot.slane %v462, 6
    %vm465 = vcmask 138240
    %v466 = vsel %vm465, %v463, %v460
    %v467 = vsel %vm363, %v463, %v464
    %v468 = vsel %vm465, %v467, %v462
    %v471 = vmul.bf16 %v429, %v466
    %v472 = vmul.bf16 %v430, %v468
    %v475 = vcombine.high %v368, %v368
    %v477 = vunpack.c.l.s4 1983009808
    %v478 = vunpack.c.0.s8 %v477
    %v479 = vlaneseq
    %v480 = vshrl.u32 %v479, 7
    %v481 = vsub.s32 %v478, %v480
    %v482 = vrot.slane %v368, %v481
    %v484 = vunpack.c.l.s4 1983009808
    %v485 = vunpack.c.0.s8 %v484
    %v486 = vlaneseq
    %v487 = vshrl.u32 %v486, 7
    %v488 = vsub.s32 %v485, %v487
    %v489 = vrot.slane %v475, %v488
    %v490 = vcombine.high %v482, %v482
    %v491 = vcombine.high %v489, %v489
    %v493 = vunpack.c.l.s4 1983009808
    %v494 = vunpack.c.0.s8 %v493
    %v495 = vlaneseq
    %v496 = vshrl.u32 %v495, 7
    %v497 = vsub.s32 %v494, %v496
    %v498 = vrot.slane %v369, %v497
    %v499 = vcombine.high %v498, %v498
    %v502 = vcombine.low %v324, %v324
    %v504 = vunpack.c.l.s4 1983009808
    %v505 = vunpack.c.0.s8 %v504
    %v506 = vlaneseq
    %v507 = vshrl.u32 %v506, 7
    %v508 = vsub.s32 %v505, %v507
    %v509 = vrot.slane %v502, %v508
    %v511 = vunpack.c.l.s4 1983009808
    %v512 = vunpack.c.0.s8 %v511
    %v513 = vlaneseq
    %v514 = vshrl.u32 %v513, 7
    %v515 = vsub.s32 %v512, %v514
    %v516 = vrot.slane %v324, %v515
    %v517 = vcombine.high %v509, %v509
    %v518 = vcombine.high %v516, %v516
    %v519 = vcombine.low %v325, %v325
    %v521 = vunpack.c.l.s4 1983009808
    %v522 = vunpack.c.0.s8 %v521
    %v523 = vlaneseq
    %v524 = vshrl.u32 %v523, 7
    %v525 = vsub.s32 %v522, %v524
    %v526 = vrot.slane %v519, %v525
    %v527 = vcombine.high %v526, %v526
    %528 = vrot.lane.b32.xlu0 %v509, 127
    %v529 = vpop.permute.xlu0 %528
    %530 = vrot.lane.b32.xlu0 %v517, 127
    %v531 = vpop.permute.xlu0 %530
    %532 = vrot.lane.b32.xlu0 %v516, 127
    %v533 = vpop.permute.xlu0 %532
    %534 = vrot.lane.b32.xlu0 %v518, 127
    %v535 = vpop.permute.xlu0 %534
    %536 = vrot.lane.b32.xlu0 %v526, 127
    %v537 = vpop.permute.xlu0 %536
    %538 = vrot.lane.b32.xlu0 %v527, 127
    %v539 = vpop.permute.xlu0 %538
    %v540 = vsel %vm419, %v529, %v531
    %v541 = vsel %vm419, %v531, %v533
    %v542 = vsel %vm419, %v533, %v535
    %v543 = vsel %vm419, %v535, %v537
    %v544 = vsel %vm419, %v537, %v539
    %v547 = vcombine.high %v411, %v411
    %v549 = vunpack.c.l.s4 1983009808
    %v550 = vunpack.c.0.s8 %v549
    %v551 = vlaneseq
    %v552 = vshrl.u32 %v551, 7
    %v553 = vsub.s32 %v550, %v552
    %v554 = vrot.slane %v411, %v553
    %v556 = vunpack.c.l.s4 1983009808
    %v557 = vunpack.c.0.s8 %v556
    %v558 = vlaneseq
    %v559 = vshrl.u32 %v558, 7
    %v560 = vsub.s32 %v557, %v559
    %v561 = vrot.slane %v547, %v560
    %v562 = vcombine.low %v554, %v554
    %v563 = vcombine.low %v561, %v561
    %v565 = vunpack.c.l.s4 1983009808
    %v566 = vunpack.c.0.s8 %v565
    %v567 = vlaneseq
    %v568 = vshrl.u32 %v567, 7
    %v569 = vsub.s32 %v566, %v568
    %v570 = vrot.slane %v412, %v569
    %v571 = vcombine.low %v570, %v570
    %572 = vrot.lane.b32.xlu0 %v562, 126
    %v573 = vpop.permute.xlu0 %572
    %574 = vrot.lane.b32.xlu0 %v554, 126
    %v575 = vpop.permute.xlu0 %574
    %576 = vrot.lane.b32.xlu0 %v563, 126
    %v577 = vpop.permute.xlu0 %576
    %578 = vrot.lane.b32.xlu0 %v561, 126
    %v579 = vpop.permute.xlu0 %578
    %580 = vrot.lane.b32.xlu0 %v571, 126
    %v581 = vpop.permute.xlu0 %580
    %582 = vrot.lane.b32.xlu0 %v570, 126
    %v583 = vpop.permute.xlu0 %582
    %vm584 = vcmask 1031168
    %v585 = vsel %vm584, %v573, %v575
    %v586 = vsel %vm584, %v575, %v577
    %v587 = vsel %vm584, %v577, %v579
    %v588 = vsel %vm584, %v579, %v581
    %v589 = vsel %vm584, %v581, %v583
    %v592 = vcombine.low %v425, %v425
    %v594 = vunpack.c.l.s4 1983009808
    %v595 = vunpack.c.0.s8 %v594
    %v596 = vlaneseq
    %v597 = vshrl.u32 %v596, 7
    %v598 = vsub.s32 %v595, %v597
    %v599 = vrot.slane %v592, %v598
    %v601 = vunpack.c.l.s4 1983009808
    %v602 = vunpack.c.0.s8 %v601
    %v603 = vlaneseq
    %v604 = vshrl.u32 %v603, 7
    %v605 = vsub.s32 %v602, %v604
    %v606 = vrot.slane %v425, %v605
    %v607 = vcombine.low %v599, %v599
    %v608 = vcombine.low %v606, %v606
    %v609 = vcombine.low %v426, %v426
    %v611 = vunpack.c.l.s4 1983009808
    %v612 = vunpack.c.0.s8 %v611
    %v613 = vlaneseq
    %v614 = vshrl.u32 %v613, 7
    %v615 = vsub.s32 %v612, %v614
    %v616 = vrot.slane %v609, %v615
    %v617 = vcombine.low %v616, %v616
    %618 = vrot.lane.b32.xlu0 %v607, 112
    %v619 = vpop.permute.xlu0 %618
    %620 = vrot.lane.b32.xlu0 %v599, 112
    %v621 = vpop.permute.xlu0 %620
    %622 = vrot.lane.b32.xlu0 %v608, 112
    %v623 = vpop.permute.xlu0 %622
    %624 = vrot.lane.b32.xlu0 %v606, 112
    %v625 = vpop.permute.xlu0 %624
    %626 = vrot.lane.b32.xlu0 %v617, 112
    %v627 = vpop.permute.xlu0 %626
    %628 = vrot.lane.b32.xlu0 %v616, 112
    %v629 = vpop.permute.xlu0 %628
    %vm630 = vcmask 916480
    %v631 = vsel %vm630, %v619, %v621
    %v632 = vsel %vm630, %v621, %v623
    %v633 = vsel %vm630, %v623, %v625
    %v634 = vsel %vm630, %v625, %v627
    %v635 = vsel %vm630, %v627, %v629
    %v638 = vcombine.high %v427, %v427
    %v640 = vunpack.c.l.s4 1983009808
    %v641 = vunpack.c.0.s8 %v640
    %v642 = vlaneseq
    %v643 = vshrl.u32 %v642, 7
    %v644 = vsub.s32 %v641, %v643
    %v645 = vrot.slane %v427, %v644
    %v647 = vunpack.c.l.s4 1983009808
    %v648 = vunpack.c.0.s8 %v647
    %v649 = vlaneseq
    %v650 = vshrl.u32 %v649, 7
    %v651 = vsub.s32 %v648, %v650
    %v652 = vrot.slane %v638, %v651
    %v653 = vcombine.high %v645, %v645
    %v654 = vcombine.high %v652, %v652
    %v656 = vunpack.c.l.s4 1983009808
    %v657 = vunpack.c.0.s8 %v656
    %v658 = vlaneseq
    %v659 = vshrl.u32 %v658, 7
    %v660 = vsub.s32 %v657, %v659
    %v661 = vrot.slane %v428, %v660
    %662 = vrot.lane.b32.xlu0 %v645, 111
    %v663 = vpop.permute.xlu0 %662
    %664 = vrot.lane.b32.xlu0 %v653, 111
    %v665 = vpop.permute.xlu0 %664
    %666 = vrot.lane.b32.xlu0 %v652, 111
    %v667 = vpop.permute.xlu0 %666
    %668 = vrot.lane.b32.xlu0 %v654, 111
    %v669 = vpop.permute.xlu0 %668
    %670 = vrot.lane.b32.xlu0 %v661, 111
    %v671 = vpop.permute.xlu0 %670
    %v672 = vsel %vm361, %v663, %v665
    %v673 = vsel %vm361, %v665, %v667
    %v674 = vsel %vm361, %v667, %v669
    %v675 = vsel %vm361, %v669, %v671
    %v678 = vcombine.low %v443, %v443
    %v680 = vunpack.c.l.s4 1983009808
    %v681 = vunpack.c.0.s8 %v680
    %v682 = vlaneseq
    %v683 = vshrl.u32 %v682, 7
    %v684 = vsub.s32 %v681, %v683
    %v685 = vrot.slane %v678, %v684
    %v687 = vunpack.c.l.s4 1983009808
    %v688 = vunpack.c.0.s8 %v687
    %v689 = vlaneseq
    %v690 = vshrl.u32 %v689, 7
    %v691 = vsub.s32 %v688, %v690
    %v692 = vrot.slane %v443, %v691
    %v693 = vcombine.high %v685, %v685
    %v694 = vcombine.high %v692, %v692
    %v695 = vcombine.low %v444, %v444
    %v697 = vunpack.c.l.s4 1983009808
    %v698 = vunpack.c.0.s8 %v697
    %v699 = vlaneseq
    %v700 = vshrl.u32 %v699, 7
    %v701 = vsub.s32 %v698, %v700
    %v702 = vrot.slane %v695, %v701
    %v703 = vcombine.high %v702, %v702
    %704 = vrot.lane.b32.xlu0 %v685, 110
    %v705 = vpop.permute.xlu0 %704
    %706 = vrot.lane.b32.xlu0 %v693, 110
    %v707 = vpop.permute.xlu0 %706
    %708 = vrot.lane.b32.xlu0 %v692, 110
    %v709 = vpop.permute.xlu0 %708
    %710 = vrot.lane.b32.xlu0 %v694, 110
    %v711 = vpop.permute.xlu0 %710
    %712 = vrot.lane.b32.xlu0 %v702, 110
    %v713 = vpop.permute.xlu0 %712
    %714 = vrot.lane.b32.xlu0 %v703, 110
    %v715 = vpop.permute.xlu0 %714
    %vm716 = vcmask 900096
    %v717 = vsel %vm716, %v705, %v707
    %v718 = vsel %vm716, %v707, %v709
    %v719 = vsel %vm716, %v709, %v711
    %v720 = vsel %vm716, %v711, %v713
    %v721 = vsel %vm716, %v713, %v715
    %v724 = vcombine.high %v457, %v457
    %v726 = vunpack.c.l.s4 1983009808
    %v727 = vunpack.c.0.s8 %v726
    %v728 = vlaneseq
    %v729 = vshrl.u32 %v728, 7
    %v730 = vsub.s32 %v727, %v729
    %v731 = vrot.slane %v457, %v730
    %v733 = vunpack.c.l.s4 1983009808
    %v734 = vunpack.c.0.s8 %v733
    %v735 = vlaneseq
    %v736 = vshrl.u32 %v735, 7
    %v737 = vsub.s32 %v734, %v736
    %v738 = vrot.slane %v724, %v737
    %v739 = vcombine.low %v731, %v731
    %v740 = vcombine.low %v738, %v738
    %v742 = vunpack.c.l.s4 1983009808
    %v743 = vunpack.c.0.s8 %v742
    %v744 = vlaneseq
    %v745 = vshrl.u32 %v744, 7
    %v746 = vsub.s32 %v743, %v745
    %v747 = vrot.slane %v458, %v746
    %v748 = vcombine.low %v747, %v747
    %749 = vrot.lane.b32.xlu0 %v739, 96
    %v750 = vpop.permute.xlu0 %749
    %751 = vrot.lane.b32.xlu0 %v731, 96
    %v752 = vpop.permute.xlu0 %751
    %753 = vrot.lane.b32.xlu0 %v740, 96
    %v754 = vpop.permute.xlu0 %753
    %755 = vrot.lane.b32.xlu0 %v738, 96
    %v756 = vpop.permute.xlu0 %755
    %757 = vrot.lane.b32.xlu0 %v748, 96
    %v758 = vpop.permute.xlu0 %757
    %759 = vrot.lane.b32.xlu0 %v747, 96
    %v760 = vpop.permute.xlu0 %759
    %vm761 = vcmask 785408
    %v762 = vsel %vm761, %v750, %v752
    %v763 = vsel %vm761, %v752, %v754
    %v764 = vsel %vm761, %v754, %v756
    %v765 = vsel %vm761, %v756, %v758
    %v766 = vsel %vm761, %v758, %v760
    %v769 = vcombine.low %v429, %v429
    %v771 = vunpack.c.l.s4 1983009808
    %v772 = vunpack.c.0.s8 %v771
    %v773 = vlaneseq
    %v774 = vshrl.u32 %v773, 7
    %v775 = vsub.s32 %v772, %v774
    %v776 = vrot.slane %v769, %v775
    %v778 = vunpack.c.l.s4 1983009808
    %v779 = vunpack.c.0.s8 %v778
    %v780 = vlaneseq
    %v781 = vshrl.u32 %v780, 7
    %v782 = vsub.s32 %v779, %v781
    %v783 = vrot.slane %v429, %v782
    %v784 = vcombine.low %v776, %v776
    %v785 = vcombine.low %v783, %v783
    %v786 = vcombine.low %v430, %v430
    %v788 = vunpack.c.l.s4 1983009808
    %v789 = vunpack.c.0.s8 %v788
    %v790 = vlaneseq
    %v791 = vshrl.u32 %v790, 7
    %v792 = vsub.s32 %v789, %v791
    %v793 = vrot.slane %v786, %v792
    %v794 = vcombine.low %v793, %v793
    %795 = vrot.lane.b32.xlu0 %v784, 95
    %v796 = vpop.permute.xlu0 %795
    %797 = vrot.lane.b32.xlu0 %v776, 95
    %v798 = vpop.permute.xlu0 %797
    %799 = vrot.lane.b32.xlu0 %v785, 95
    %v800 = vpop.permute.xlu0 %799
    %801 = vrot.lane.b32.xlu0 %v783, 95
    %v802 = vpop.permute.xlu0 %801
    %803 = vrot.lane.b32.xlu0 %v794, 95
    %v804 = vpop.permute.xlu0 %803
    %805 = vrot.lane.b32.xlu0 %v793, 95
    %v806 = vpop.permute.xlu0 %805
    %vm807 = vcmask 777216
    %v808 = vsel %vm807, %v796, %v798
    %v809 = vsel %vm807, %v798, %v800
    %v810 = vsel %vm807, %v800, %v802
    %v811 = vsel %vm807, %v802, %v804
    %v812 = vsel %vm807, %v804, %v806
    %v815 = vcombine.high %v471, %v471
    %v817 = vunpack.c.l.s4 1983009808
    %v818 = vunpack.c.0.s8 %v817
    %v819 = vlaneseq
    %v820 = vshrl.u32 %v819, 7
    %v821 = vsub.s32 %v818, %v820
    %v822 = vrot.slane %v471, %v821
    %v824 = vunpack.c.l.s4 1983009808
    %v825 = vunpack.c.0.s8 %v824
    %v826 = vlaneseq
    %v827 = vshrl.u32 %v826, 7
    %v828 = vsub.s32 %v825, %v827
    %v829 = vrot.slane %v815, %v828
    %v830 = vcombine.high %v822, %v822
    %v831 = vcombine.high %v829, %v829
    %v833 = vunpack.c.l.s4 1983009808
    %v834 = vunpack.c.0.s8 %v833
    %v835 = vlaneseq
    %v836 = vshrl.u32 %v835, 7
    %v837 = vsub.s32 %v834, %v836
    %v838 = vrot.slane %v472, %v837
    %v839 = vcombine.high %v838, %v838
    %840 = vrot.lane.b32.xlu0 %v822, 94
    %v841 = vpop.permute.xlu0 %840
    %842 = vrot.lane.b32.xlu0 %v830, 94
    %v843 = vpop.permute.xlu0 %842
    %844 = vrot.lane.b32.xlu0 %v829, 94
    %v845 = vpop.permute.xlu0 %844
    %846 = vrot.lane.b32.xlu0 %v831, 94
    %v847 = vpop.permute.xlu0 %846
    %848 = vrot.lane.b32.xlu0 %v838, 94
    %v849 = vpop.permute.xlu0 %848
    %850 = vrot.lane.b32.xlu0 %v839, 94
    %v851 = vpop.permute.xlu0 %850
    %vm852 = vcmask 769024
    %v853 = vsel %vm852, %v841, %v843
    %v854 = vsel %vm852, %v843, %v845
    %v855 = vsel %vm852, %v845, %v847
    %v856 = vsel %vm852, %v847, %v849
    %v857 = vsel %vm852, %v849, %v851
    %vm858 = vcmask 1041408
    %v861 = vsel %vm858, %v482, %v540
    %v864 = vsel %vm858, %v490, %v541
    %v867 = vsel %vm858, %v489, %v542
    %v870 = vsel %vm858, %v491, %v543
    %v873 = vsel %vm858, %v498, %v544
    %v876 = vsel %vm858, %v499, %v539
    %vm877 = vcmask 1043456
    %v879 = vsel %vm877, %v861, %v585
    %v881 = vsel %vm877, %v864, %v586
    %v883 = vsel %vm877, %v867, %v587
    %v885 = vsel %vm877, %v870, %v588
    %v887 = vsel %vm877, %v873, %v589
    %v889 = vsel %vm877, %v876, %v583
    %vm890 = vcmask 1045504
    %v892 = vsel %vm890, %v879, %v631
    %v894 = vsel %vm890, %v881, %v632
    %v896 = vsel %vm890, %v883, %v633
    %v898 = vsel %vm890, %v885, %v634
    %v900 = vsel %vm890, %v887, %v635
    %v902 = vsel %vm890, %v889, %v629
    %v905 = vsel %vm858, %v663, %v705
    %v908 = vsel %vm858, %v672, %v717
    %v911 = vsel %vm858, %v673, %v718
    %v914 = vsel %vm858, %v674, %v719
    %v917 = vsel %vm858, %v675, %v720
    %v920 = vsel %vm858, %v671, %v721
    %v922 = vsel %vm877, %v905, %v750
    %v924 = vsel %vm877, %v908, %v762
    %v926 = vsel %vm877, %v911, %v763
    %v928 = vsel %vm877, %v914, %v764
    %v930 = vsel %vm877, %v917, %v765
    %v932 = vsel %vm877, %v920, %v766
    %v934 = vsel %vm890, %v922, %v796
    %v936 = vsel %vm890, %v924, %v808
    %v938 = vsel %vm890, %v926, %v809
    %v940 = vsel %vm890, %v928, %v810
    %v942 = vsel %vm890, %v930, %v811
    %v944 = vsel %vm890, %v932, %v812
    %v945 = vld [vmem:[%s1] sm:$0xf]
    %v946 = vld [vmem:[%s2] sm:$0xff]
    %948 = vset.pattern.permute.xlu0 0
    %949 = vperm.xlu0 %948, %v946
    %v950 = vpop.permute.xlu0 %949
    %964 = vrot.lane.b32.xlu0 %v892, 17
    %v965 = vpop.permute.xlu0 %964
    %966 = vrot.lane.b32.xlu0 %v894, 17
    %v967 = vpop.permute.xlu0 %966
    %968 = vrot.lane.b32.xlu0 %v896, 17
    %v969 = vpop.permute.xlu0 %968
    %970 = vrot.lane.b32.xlu0 %v898, 17
    %v971 = vpop.permute.xlu0 %970
    %972 = vrot.lane.b32.xlu0 %v900, 17
    %v973 = vpop.permute.xlu0 %972
    %974 = vrot.lane.b32.xlu0 %v902, 17
    %v975 = vpop.permute.xlu0 %974
    %976 = vrot.lane.b32.xlu0 %v934, 17
    %v977 = vpop.permute.xlu0 %976
    %978 = vrot.lane.b32.xlu0 %v936, 17
    %v979 = vpop.permute.xlu0 %978
    %980 = vrot.lane.b32.xlu0 %v938, 17
    %v981 = vpop.permute.xlu0 %980
    %982 = vrot.lane.b32.xlu0 %v940, 17
    %v983 = vpop.permute.xlu0 %982
    %984 = vrot.lane.b32.xlu0 %v942, 17
    %v985 = vpop.permute.xlu0 %984
    %986 = vrot.lane.b32.xlu0 %v944, 17
    %v987 = vpop.permute.xlu0 %986
    %988 = vrot.lane.b32.xlu0 %v841, 17
    %v989 = vpop.permute.xlu0 %988
    %990 = vrot.lane.b32.xlu0 %v853, 17
    %v991 = vpop.permute.xlu0 %990
    %992 = vrot.lane.b32.xlu0 %v854, 17
    %v993 = vpop.permute.xlu0 %992
    %994 = vrot.lane.b32.xlu0 %v855, 17
    %v995 = vpop.permute.xlu0 %994
    %996 = vrot.lane.b32.xlu0 %v856, 17
    %v997 = vpop.permute.xlu0 %996
    %998 = vrot.lane.b32.xlu0 %v857, 17
    %v999 = vpop.permute.xlu0 %998
    %v1000 = vsel %vm465, %v965, %v967
    %v1001 = vsel %vm465, %v967, %v969
    %v1002 = vsel %vm465, %v969, %v971
    %v1003 = vsel %vm465, %v971, %v973
    %v1004 = vsel %vm465, %v973, %v975
    %v1005 = vsel %vm465, %v977, %v979
    %v1006 = vsel %vm465, %v979, %v981
    %v1007 = vsel %vm465, %v981, %v983
    %v1008 = vsel %vm465, %v983, %v985
    %v1009 = vsel %vm465, %v985, %v987
    %v1010 = vsel %vm465, %v989, %v991
    %v1011 = vsel %vm465, %v991, %v993
    %v1012 = vsel %vm465, %v993, %v995
    %v1013 = vsel %vm465, %v995, %v997
    %v1014 = vsel %vm465, %v997, %v999
    %vm1025 = vcmask 293888
    %v1027 = vsel %vm1025, %v945, 0
    %v1030 = vsel %vm858, %v1010, 0
    %v1033 = vsel %vm858, %v1011, 0
    %v1036 = vsel %vm858, %v1012, 0
    %v1039 = vsel %vm858, %v1013, 0
    %v1042 = vsel %vm858, %v1014, 0
    %1044 = vmatprep.subr.bf16.mxu0 0
    %1045 = vmatpush1.bf16.msra.mxu0 0
    %1046 = vmatprep.subr.bf16.mxu0 0
    %1047 = vmatpush1.bf16.msra.mxu0 0
    %1048 = vmatprep.subr.bf16.mxu0 0
    %1049 = vmatpush1.bf16.msra.mxu0 0
    %1050 = vmatprep.subr.bf16.mxu0 0
    %1051 = vmatpush1.bf16.msra.mxu0 0
    %1052 = vmatprep.subr.bf16.mxu0 0
    %1053 = vmatpush1.bf16.msra.mxu0 0
    %1054 = vmatprep.subr.bf16.mxu0 %v1033
    %1055 = vmatpush1.bf16.msra.mxu0 %v1030
    %1056 = vmatprep.subr.bf16.mxu0 %v1006
    %1057 = vmatpush1.bf16.msra.mxu0 %v1005
    %1058 = vmatprep.subr.bf16.mxu0 %v1001
    %1059 = vmatpush1.bf16.msra.mxu0 %v1000
    %1060 = vmatprep.subr.bf16.mxu0 0
    %1061 = vmatpush2.bf16.msra.mxu0 0
    %1062 = vmatprep.subr.bf16.mxu0 0
    %1063 = vmatpush2.bf16.msra.mxu0 0
    %1064 = vmatprep.subr.bf16.mxu0 0
    %1065 = vmatpush2.bf16.msra.mxu0 0
    %1066 = vmatprep.subr.bf16.mxu0 0
    %1067 = vmatpush2.bf16.msra.mxu0 0
    %1068 = vmatprep.subr.bf16.mxu0 0
    %1069 = vmatpush2.bf16.msra.mxu0 0
    %1070 = vmatprep.subr.bf16.mxu0 0
    %1071 = vmatpush2.bf16.msra.mxu0 0
    %1072 = vmatprep.subr.bf16.mxu0 0
    %1073 = vmatpush2.bf16.msra.mxu0 0
    %1074 = vmatprep.subr.bf16.mxu0 0
    %1075 = vmatpush2.bf16.msra.mxu0 0
    %1076 = vmatprep.mubr.bf16.mxu0 0
    %1077 = vmatmul.mubr.bf16.gmra.mxu0 %v1027
    %v1078 = vpop.f32.mrf.mxu0
    %v1079 = vadd.f32 %v950, %v1078
    %v1080 = vpop.f32.mrf.mxu0
    %v1081 = vadd.f32 %v950, %v1080
    %v1082 = vpop.f32.mrf.mxu0
    %v1083 = vpop.f32.mrf.mxu0
    %1084 = vdwg.mxu0
    %1085 = vmatprep.subr.bf16.mxu0 0
    %1086 = vmatpush1.bf16.msra.mxu0 0
    %1087 = vmatprep.subr.bf16.mxu0 0
    %1088 = vmatpush1.bf16.msra.mxu0 0
    %1089 = vmatprep.subr.bf16.mxu0 0
    %1090 = vmatpush1.bf16.msra.mxu0 0
    %1091 = vmatprep.subr.bf16.mxu0 0
    %1092 = vmatpush1.bf16.msra.mxu0 0
    %1093 = vmatprep.subr.bf16.mxu0 0
    %1094 = vmatpush1.bf16.msra.mxu0 0
    %1095 = vmatprep.subr.bf16.mxu0 %v1039
    %1096 = vmatpush1.bf16.msra.mxu0 %v1036
    %1097 = vmatprep.subr.bf16.mxu0 %v1008
    %1098 = vmatpush1.bf16.msra.mxu0 %v1007
    %1099 = vmatprep.subr.bf16.mxu0 %v1003
    %1100 = vmatpush1.bf16.msra.mxu0 %v1002
    %1101 = vmatprep.subr.bf16.mxu0 0
    %1102 = vmatpush2.bf16.msra.mxu0 0
    %1103 = vmatprep.subr.bf16.mxu0 0
    %1104 = vmatpush2.bf16.msra.mxu0 0
    %1105 = vmatprep.subr.bf16.mxu0 0
    %1106 = vmatpush2.bf16.msra.mxu0 0
    %1107 = vmatprep.subr.bf16.mxu0 0
    %1108 = vmatpush2.bf16.msra.mxu0 0
    %1109 = vmatprep.subr.bf16.mxu0 0
    %1110 = vmatpush2.bf16.msra.mxu0 0
    %1111 = vmatprep.subr.bf16.mxu0 0
    %1112 = vmatpush2.bf16.msra.mxu0 0
    %1113 = vmatprep.subr.bf16.mxu0 0
    %1114 = vmatpush2.bf16.msra.mxu0 0
    %1115 = vmatprep.subr.bf16.mxu0 0
    %1116 = vmatpush2.bf16.msra.mxu0 0
    %1117 = vmatprep.mubr.bf16.mxu0 0
    %1118 = vmatmul.mubr.bf16.gmra.mxu0 %v1027
    %v1119 = vpop.f32.mrf.mxu0
    %v1120 = vpop.f32.mrf.mxu0
    %v1121 = vadd.f32 %v950, %v1120
    %v1122 = vpop.f32.mrf.mxu0
    %v1123 = vpop.f32.mrf.mxu0
    %1124 = vdwg.mxu0
    %1125 = vmatprep.subr.bf16.mxu0 0
    %1126 = vmatpush1.bf16.msra.mxu0 0
    %1127 = vmatprep.subr.bf16.mxu0 0
    %1128 = vmatpush1.bf16.msra.mxu0 0
    %1129 = vmatprep.subr.bf16.mxu0 0
    %1130 = vmatpush1.bf16.msra.mxu0 0
    %1131 = vmatprep.subr.bf16.mxu0 0
    %1132 = vmatpush1.bf16.msra.mxu0 0
    %1133 = vmatprep.subr.bf16.mxu0 0
    %1134 = vmatpush1.bf16.msra.mxu0 0
    %1135 = vmatprep.subr.bf16.mxu0 0
    %1136 = vmatpush1.bf16.msra.mxu0 %v1042
    %1137 = vmatprep.subr.bf16.mxu0 0
    %1138 = vmatpush1.bf16.msra.mxu0 %v1009
    %1139 = vmatprep.subr.bf16.mxu0 0
    %1140 = vmatpush1.bf16.msra.mxu0 %v1004
    %1141 = vmatprep.subr.bf16.mxu0 0
    %1142 = vmatpush2.bf16.msra.mxu0 0
    %1143 = vmatprep.subr.bf16.mxu0 0
    %1144 = vmatpush2.bf16.msra.mxu0 0
    %1145 = vmatprep.subr.bf16.mxu0 0
    %1146 = vmatpush2.bf16.msra.mxu0 0
    %1147 = vmatprep.subr.bf16.mxu0 0
    %1148 = vmatpush2.bf16.msra.mxu0 0
    %1149 = vmatprep.subr.bf16.mxu0 0
    %1150 = vmatpush2.bf16.msra.mxu0 0
    %1151 = vmatprep.subr.bf16.mxu0 0
    %1152 = vmatpush2.bf16.msra.mxu0 0
    %1153 = vmatprep.subr.bf16.mxu0 0
    %1154 = vmatpush2.bf16.msra.mxu0 0
    %1155 = vmatprep.subr.bf16.mxu0 0
    %1156 = vmatpush2.bf16.msra.mxu0 0
    %1157 = vmatprep.mubr.bf16.mxu0 0
    %1158 = vmatmul.mubr.bf16.gmra.mxu0 %v1027
    %v1159 = vpop.f32.mrf.mxu0
    %v1160 = vadd.f32 %v950, %v1159
    %v1161 = vpop.f32.mrf.mxu0
    %v1162 = vpop.f32.mrf.mxu0
    %v1163 = vpop.f32.mrf.mxu0
    %1164 = vdwg.mxu0
    %vm1165 = vcmp.ge.f32.partialorder %v1079, 0.0
    %vm1166 = vcmp.ge.f32.partialorder %v1081, 0.0
    %vm1167 = vcmp.ge.f32.partialorder %v1121, 0.0
    %vm1168 = vcmp.ge.f32.partialorder %v1160, 0.0
    %v1169 = vmul.f32 %v1079, 0.01
    %v1170 = vmul.f32 %v1081, 0.01
    %v1171 = vmul.f32 %v1121, 0.01
    %v1172 = vmul.f32 %v1160, 0.01
    %v1173 = vsel %vm1165, %v1079, %v1169
    %v1174 = vsel %vm1166, %v1081, %v1170
    %v1175 = vsel %vm1167, %v1121, %v1171
    %v1176 = vsel %vm1168, %v1160, %v1172
    %v1177 = vpack.c.bf16 %v1173, %v1173
    %v1178 = vpack.c.bf16 %v1174, %v1174
    %v1179 = vpack.c.bf16 %v1175, %v1175
    %v1180 = vpack.c.bf16 %v1176, %v1176
    %v1183 = vunpack.c.l.b16 %v1177
    %v1184 = vunpack.c.l.b16 %v1178
    %v1185 = vpack.c.b16 %v1184, %v1183
    %1187 = vst [vmem:[#allocation3 + $0x4] sm:$0xff] %v1185
    %v1190 = vunpack.c.l.b16 %v1179
    %v1191 = vunpack.c.l.b16 %v1180
    %v1192 = vpack.c.b16 %v1191, %v1190
    %1194 = vst [vmem:[#allocation3 + $0x10] sm:$0xff] %v1192
    %v1195 = vld [vmem:[%s5] sm:$0xf]
    %v1196 = vld [vmem:[#allocation2 + $0x2] sm:$0xff]
    %v1197 = vld [vmem:[#allocation2 + $0xa] sm:$0x3]
    %v1200 = vcombine.high %v1196, %v1196
    %v1202 = vunpack.c.l.s4 1983009808
    %v1203 = vunpack.c.0.s8 %v1202
    %v1204 = vlaneseq
    %v1205 = vshrl.u32 %v1204, 7
    %v1206 = vsub.s32 %v1203, %v1205
    %v1207 = vrot.slane %v1196, %v1206
    %v1209 = vunpack.c.l.s4 1983009808
    %v1210 = vunpack.c.0.s8 %v1209
    %v1211 = vlaneseq
    %v1212 = vshrl.u32 %v1211, 7
    %v1213 = vsub.s32 %v1210, %v1212
    %v1214 = vrot.slane %v1200, %v1213
    %v1215 = vcombine.high %v1207, %v1207
    %v1216 = vcombine.high %v1214, %v1214
    %v1218 = vunpack.c.l.s4 1983009808
    %v1219 = vunpack.c.0.s8 %v1218
    %v1220 = vlaneseq
    %v1221 = vshrl.u32 %v1220, 7
    %v1222 = vsub.s32 %v1219, %v1221
    %v1223 = vrot.slane %v1197, %v1222
    %vm1224 = vcmask 31744
    %v1226 = vsel %vm1224, %v1195, 0
    %v1229 = vsel %vm858, %v1207, 0
    %v1232 = vsel %vm858, %v1215, 0
    %v1235 = vsel %vm858, %v1214, 0
    %v1238 = vsel %vm858, %v1216, 0
    %v1241 = vsel %vm858, %v1223, 0
    %1243 = vmatprep.subr.bf16.mxu0 0
    %1244 = vmatpush1.bf16.msra.mxu0 0
    %1245 = vmatprep.subr.bf16.mxu0 0
    %1246 = vmatpush1.bf16.msra.mxu0 0
    %1247 = vmatprep.subr.bf16.mxu0 0
    %1248 = vmatpush1.bf16.msra.mxu0 0
    %1249 = vmatprep.subr.bf16.mxu0 0
    %1250 = vmatpush1.bf16.msra.mxu0 0
    %1251 = vmatprep.subr.bf16.mxu0 0
    %1252 = vmatpush1.bf16.msra.mxu0 0
    %1253 = vmatprep.subr.bf16.mxu0 0
    %1254 = vmatpush1.bf16.msra.mxu0 0
    %1255 = vmatprep.subr.bf16.mxu0 0
    %1256 = vmatpush1.bf16.msra.mxu0 0
    %1257 = vmatprep.subr.bf16.mxu0 %v1232
    %1258 = vmatpush1.bf16.msra.mxu0 %v1229
    %1259 = vmatprep.subr.bf16.mxu0 0
    %1260 = vmatpush2.bf16.msra.mxu0 0
    %1261 = vmatprep.subr.bf16.mxu0 0
    %1262 = vmatpush2.bf16.msra.mxu0 0
    %1263 = vmatprep.subr.bf16.mxu0 0
    %1264 = vmatpush2.bf16.msra.mxu0 0
    %1265 = vmatprep.subr.bf16.mxu0 0
    %1266 = vmatpush2.bf16.msra.mxu0 0
    %1267 = vmatprep.subr.bf16.mxu0 0
    %1268 = vmatpush2.bf16.msra.mxu0 0
    %1269 = vmatprep.subr.bf16.mxu0 0
    %1270 = vmatpush2.bf16.msra.mxu0 0
    %1271 = vmatprep.subr.bf16.mxu0 0
    %1272 = vmatpush2.bf16.msra.mxu0 0
    %1273 = vmatprep.subr.bf16.mxu0 0
    %1274 = vmatpush2.bf16.msra.mxu0 0
    %1275 = vmatprep.mubr.bf16.mxu0 0
    %1276 = vmatmul.mubr.bf16.gmra.mxu0 %v1226
    %v1277 = vpop.f32.mrf.mxu0
    %v1278 = vadd.f32 0.0, %v1277
    %v1279 = vpop.f32.mrf.mxu0
    %v1280 = vadd.f32 0.0, %v1279
    %v1281 = vpop.f32.mrf.mxu0
    %v1282 = vpop.f32.mrf.mxu0
    %1283 = vdwg.mxu0
    %1284 = vmatprep.subr.bf16.mxu0 0
    %1285 = vmatpush1.bf16.msra.mxu0 0
    %1286 = vmatprep.subr.bf16.mxu0 0
    %1287 = vmatpush1.bf16.msra.mxu0 0
    %1288 = vmatprep.subr.bf16.mxu0 0
    %1289 = vmatpush1.bf16.msra.mxu0 0
    %1290 = vmatprep.subr.bf16.mxu0 0
    %1291 = vmatpush1.bf16.msra.mxu0 0
    %1292 = vmatprep.subr.bf16.mxu0 0
    %1293 = vmatpush1.bf16.msra.mxu0 0
    %1294 = vmatprep.subr.bf16.mxu0 0
    %1295 = vmatpush1.bf16.msra.mxu0 0
    %1296 = vmatprep.subr.bf16.mxu0 0
    %1297 = vmatpush1.bf16.msra.mxu0 0
    %1298 = vmatprep.subr.bf16.mxu0 %v1238
    %1299 = vmatpush1.bf16.msra.mxu0 %v1235
    %1300 = vmatprep.subr.bf16.mxu0 0
    %1301 = vmatpush2.bf16.msra.mxu0 0
    %1302 = vmatprep.subr.bf16.mxu0 0
    %1303 = vmatpush2.bf16.msra.mxu0 0
    %1304 = vmatprep.subr.bf16.mxu0 0
    %1305 = vmatpush2.bf16.msra.mxu0 0
    %1306 = vmatprep.subr.bf16.mxu0 0
    %1307 = vmatpush2.bf16.msra.mxu0 0
    %1308 = vmatprep.subr.bf16.mxu0 0
    %1309 = vmatpush2.bf16.msra.mxu0 0
    %1310 = vmatprep.subr.bf16.mxu0 0
    %1311 = vmatpush2.bf16.msra.mxu0 0
    %1312 = vmatprep.subr.bf16.mxu0 0
    %1313 = vmatpush2.bf16.msra.mxu0 0
    %1314 = vmatprep.subr.bf16.mxu0 0
    %1315 = vmatpush2.bf16.msra.mxu0 0
    %1316 = vmatprep.mubr.bf16.mxu0 0
    %1317 = vmatmul.mubr.bf16.gmra.mxu0 %v1226
    %v1318 = vpop.f32.mrf.mxu0
    %v1319 = vpop.f32.mrf.mxu0
    %v1320 = vadd.f32 0.0, %v1319
    %v1321 = vpop.f32.mrf.mxu0
    %v1322 = vpop.f32.mrf.mxu0
    %1323 = vdwg.mxu0
    %1324 = vmatprep.subr.bf16.mxu0 0
    %1325 = vmatpush1.bf16.msra.mxu0 0
    %1326 = vmatprep.subr.bf16.mxu0 0
    %1327 = vmatpush1.bf16.msra.mxu0 0
    %1328 = vmatprep.subr.bf16.mxu0 0
    %1329 = vmatpush1.bf16.msra.mxu0 0
    %1330 = vmatprep.subr.bf16.mxu0 0
    %1331 = vmatpush1.bf16.msra.mxu0 0
    %1332 = vmatprep.subr.bf16.mxu0 0
    %1333 = vmatpush1.bf16.msra.mxu0 0
    %1334 = vmatprep.subr.bf16.mxu0 0
    %1335 = vmatpush1.bf16.msra.mxu0 0
    %1336 = vmatprep.subr.bf16.mxu0 0
    %1337 = vmatpush1.bf16.msra.mxu0 0
    %1338 = vmatprep.subr.bf16.mxu0 0
    %1339 = vmatpush1.bf16.msra.mxu0 %v1241
    %1340 = vmatprep.subr.bf16.mxu0 0
    %1341 = vmatpush2.bf16.msra.mxu0 0
    %1342 = vmatprep.subr.bf16.mxu0 0
    %1343 = vmatpush2.bf16.msra.mxu0 0
    %1344 = vmatprep.subr.bf16.mxu0 0
    %1345 = vmatpush2.bf16.msra.mxu0 0
    %1346 = vmatprep.subr.bf16.mxu0 0
    %1347 = vmatpush2.bf16.msra.mxu0 0
    %1348 = vmatprep.subr.bf16.mxu0 0
    %1349 = vmatpush2.bf16.msra.mxu0 0
    %1350 = vmatprep.subr.bf16.mxu0 0
    %1351 = vmatpush2.bf16.msra.mxu0 0
    %1352 = vmatprep.subr.bf16.mxu0 0
    %1353 = vmatpush2.bf16.msra.mxu0 0
    %1354 = vmatprep.subr.bf16.mxu0 0
    %1355 = vmatpush2.bf16.msra.mxu0 0
    %1356 = vmatprep.mubr.bf16.mxu0 0
    %1357 = vmatmul.mubr.bf16.gmra.mxu0 %v1226
    %v1358 = vpop.f32.mrf.mxu0
    %v1359 = vadd.f32 0.0, %v1358
    %v1360 = vpop.f32.mrf.mxu0
    %v1361 = vpop.f32.mrf.mxu0
    %v1362 = vpop.f32.mrf.mxu0
    %1363 = vdwg.mxu0
    %v1364 = vld [vmem:[#allocation3] sm:$0xff]
    %v1365 = vld [vmem:[#allocation3 + $0x8] sm:$0xff]
    %v1366 = vld [vmem:[#allocation3 + $0x10] sm:$0xff]
    %v1367 = vunpack.c.l.b16 %v293
    %v1368 = vunpack.c.l.b16 %v294
    %v1369 = vunpack.c.l.b16 %v295
    %v1370 = vunpack.c.l.b16 %v296
    %v1371 = vunpack.c.l.b16 %v297
    %v1372 = vpack.c.b16 %v1368, %v1367
    %v1373 = vpack.c.b16 %v1370, %v1369
    %v1374 = vpack.c.b16 %v1371, %v1371
    %1375 = vrot.lane.b32.xlu0 %v1372, 111
    %v1376 = vpop.permute.xlu0 %1375
    %1377 = vrot.lane.b32.xlu0 %v1373, 111
    %v1378 = vpop.permute.xlu0 %1377
    %1379 = vrot.lane.b32.xlu0 %v1374, 111
    %v1380 = vpop.permute.xlu0 %1379
    %v1381 = vrot.slane %v1376, 4
    %v1382 = vrot.slane %v1378, 4
    %v1383 = vrot.slane %v1380, 4
    %v1384 = vsel %vm361, %v1381, %v1376
    %vm1385 = vcmask 1043456
    %v1386 = vsel %vm1385, %v1381, %v1382
    %v1387 = vsel %vm361, %v1386, %v1378
    %v1388 = vsel %vm1385, %v1382, %v1383
    %v1389 = vsel %vm361, %v1388, %v1380
    %v1393 = vmul.bf16 %v1364, %v1384
    %v1394 = vmul.bf16 %v1365, %v1387
    %v1395 = vmul.bf16 %v1366, %v1389
    %v1396 = vunpack.c.l.b16 %v313
    %v1397 = vunpack.c.l.b16 %v314
    %v1398 = vunpack.c.l.b16 %v315
    %v1399 = vunpack.c.l.b16 %v316
    %v1400 = vunpack.c.l.b16 %v317
    %v1401 = vpack.c.b16 %v1397, %v1396
    %v1402 = vpack.c.b16 %v1399, %v1398
    %v1403 = vpack.c.b16 %v1400, %v1400
    %1404 = vrot.lane.b32.xlu0 %v1401, 113
    %v1405 = vpop.permute.xlu0 %1404
    %1406 = vrot.lane.b32.xlu0 %v1402, 113
    %v1407 = vpop.permute.xlu0 %1406
    %1408 = vrot.lane.b32.xlu0 %v1403, 113
    %v1409 = vpop.permute.xlu0 %1408
    %v1410 = vrot.slane %v1405, 4
    %v1411 = vrot.slane %v1407, 4
    %v1412 = vrot.slane %v1409, 4
    %v1413 = vsel %vm405, %v1410, %v1405
    %v1414 = vsel %vm1385, %v1410, %v1411
    %v1415 = vsel %vm405, %v1414, %v1407
    %v1416 = vsel %vm1385, %v1411, %v1412
    %v1417 = vsel %vm405, %v1416, %v1409
    %v1421 = vmul.bf16 %v1364, %v1413
    %v1422 = vmul.bf16 %v1365, %v1415
    %v1423 = vmul.bf16 %v1366, %v1417
    %1424 = vrot.lane.b32.xlu0 %v1372, 127
    %v1425 = vpop.permute.xlu0 %1424
    %1426 = vrot.lane.b32.xlu0 %v1373, 127
    %v1427 = vpop.permute.xlu0 %1426
    %1428 = vrot.lane.b32.xlu0 %v1374, 127
    %v1429 = vpop.permute.xlu0 %1428
    %v1430 = vrot.slane %v1425, 4
    %v1431 = vrot.slane %v1427, 4
    %v1432 = vrot.slane %v1429, 4
    %v1433 = vsel %vm419, %v1430, %v1425
    %v1434 = vsel %vm1385, %v1430, %v1431
    %v1435 = vsel %vm419, %v1434, %v1427
    %v1436 = vsel %vm1385, %v1431, %v1432
    %v1437 = vsel %vm419, %v1436, %v1429
    %v1441 = vmul.bf16 %v1364, %v1433
    %v1442 = vmul.bf16 %v1365, %v1435
    %v1443 = vmul.bf16 %v1366, %v1437
    %v1444 = vld [vmem:[#allocation3 + $0x4] sm:$0xff]
    %v1445 = vld [vmem:[#allocation3 + $0xc] sm:$0xff]
    %v1446 = vld [vmem:[#allocation3 + $0x14] sm:$0xf]
    %v1447 = vld [vmem:[#allocation3 + $0x4] sm:$0xff]
    %v1448 = vld [vmem:[#allocation3 + $0xc] sm:$0xff]
    %v1449 = vld [vmem:[#allocation3 + $0x14] sm:$0xff]
    %1450 = vrot.lane.b32.xlu0 %v1401, 1
    %v1451 = vpop.permute.xlu0 %1450
    %1452 = vrot.lane.b32.xlu0 %v1402, 1
    %v1453 = vpop.permute.xlu0 %1452
    %1454 = vrot.lane.b32.xlu0 %v1403, 1
    %v1455 = vpop.permute.xlu0 %1454
    %v1456 = vrot.slane %v1451, 4
    %v1457 = vrot.slane %v1453, 4
    %v1458 = vrot.slane %v1455, 4
    %v1459 = vsel %vm437, %v1456, %v1451
    %v1460 = vsel %vm1385, %v1456, %v1457
    %v1461 = vsel %vm437, %v1460, %v1453
    %v1462 = vsel %vm1385, %v1457, %v1458
    %v1463 = vsel %vm437, %v1462, %v1455
    %v1467 = vmul.bf16 %v1447, %v1459
    %v1468 = vmul.bf16 %v1448, %v1461
    %v1469 = vmul.bf16 %v1449, %v1463
    %1470 = vrot.lane.b32.xlu0 %v1372, 15
    %v1471 = vpop.permute.xlu0 %1470
    %1472 = vrot.lane.b32.xlu0 %v1373, 15
    %v1473 = vpop.permute.xlu0 %1472
    %1474 = vrot.lane.b32.xlu0 %v1374, 15
    %v1475 = vpop.permute.xlu0 %1474
    %v1476 = vrot.slane %v1471, 4
    %v1477 = vrot.slane %v1473, 4
    %v1478 = vrot.slane %v1475, 4
    %v1479 = vsel %vm451, %v1476, %v1471
    %v1480 = vsel %vm1385, %v1476, %v1477
    %v1481 = vsel %vm451, %v1480, %v1473
    %v1482 = vsel %vm1385, %v1477, %v1478
    %v1483 = vsel %vm451, %v1482, %v1475
    %v1487 = vmul.bf16 %v1447, %v1479
    %v1488 = vmul.bf16 %v1448, %v1481
    %v1489 = vmul.bf16 %v1449, %v1483
    %1490 = vrot.lane.b32.xlu0 %v1401, 17
    %v1491 = vpop.permute.xlu0 %1490
    %1492 = vrot.lane.b32.xlu0 %v1402, 17
    %v1493 = vpop.permute.xlu0 %1492
    %1494 = vrot.lane.b32.xlu0 %v1403, 17
    %v1495 = vpop.permute.xlu0 %1494
    %v1496 = vrot.slane %v1491, 4
    %v1497 = vrot.slane %v1493, 4
    %v1498 = vrot.slane %v1495, 4
    %v1499 = vsel %vm465, %v1496, %v1491
    %v1500 = vsel %vm1385, %v1496, %v1497
    %v1501 = vsel %vm465, %v1500, %v1493
    %v1502 = vsel %vm1385, %v1497, %v1498
    %v1503 = vsel %vm465, %v1502, %v1495
    %v1507 = vmul.bf16 %v1447, %v1499
    %v1508 = vmul.bf16 %v1448, %v1501
    %v1509 = vmul.bf16 %v1449, %v1503
    %v1513 = vunpack.c.l.b16 %v1393
    %v1514 = vunpack.c.h.b16 %v1393
    %v1515 = vunpack.c.l.b16 %v1394
    %v1516 = vunpack.c.h.b16 %v1394
    %v1517 = vunpack.c.l.b16 %v1395
    %v1518 = vunpack.c.h.b16 %v1395
    %v1519 = vpack.c.b16 %v1513, %v1513
    %v1520 = vpack.c.b16 %v1514, %v1514
    %v1521 = vpack.c.b16 %v1515, %v1515
    %v1522 = vpack.c.b16 %v1516, %v1516
    %v1523 = vpack.c.b16 %v1517, %v1517
    %v1524 = vpack.c.b16 %v1518, %v1518
    %v1528 = vunpack.c.l.b16 %v1364
    %v1529 = vunpack.c.h.b16 %v1364
    %v1530 = vunpack.c.l.b16 %v1365
    %v1531 = vunpack.c.h.b16 %v1365
    %v1532 = vunpack.c.l.b16 %v1366
    %v1533 = vunpack.c.h.b16 %v1366
    %v1534 = vpack.c.b16 %v1528, %v1528
    %v1535 = vpack.c.b16 %v1529, %v1529
    %v1536 = vpack.c.b16 %v1530, %v1530
    %v1537 = vpack.c.b16 %v1531, %v1531
    %v1538 = vpack.c.b16 %v1532, %v1532
    %v1539 = vpack.c.b16 %v1533, %v1533
    %1540 = vrot.lane.b32.xlu0 %v1534, 127
    %v1541 = vpop.permute.xlu0 %1540
    %1542 = vrot.lane.b32.xlu0 %v1535, 127
    %v1543 = vpop.permute.xlu0 %1542
    %1544 = vrot.lane.b32.xlu0 %v1536, 127
    %v1545 = vpop.permute.xlu0 %1544
    %1546 = vrot.lane.b32.xlu0 %v1537, 127
    %v1547 = vpop.permute.xlu0 %1546
    %1548 = vrot.lane.b32.xlu0 %v1538, 127
    %v1549 = vpop.permute.xlu0 %1548
    %1550 = vrot.lane.b32.xlu0 %v1539, 127
    %v1551 = vpop.permute.xlu0 %1550
    %v1552 = vsel %vm419, %v1541, %v1543
    %v1553 = vsel %vm419, %v1543, %v1545
    %v1554 = vsel %vm419, %v1545, %v1547
    %v1555 = vsel %vm419, %v1547, %v1549
    %v1556 = vsel %vm419, %v1549, %v1551
    %v1560 = vunpack.c.l.b16 %v1421
    %v1561 = vunpack.c.h.b16 %v1421
    %v1562 = vunpack.c.l.b16 %v1422
    %v1563 = vunpack.c.h.b16 %v1422
    %v1564 = vunpack.c.l.b16 %v1423
    %v1565 = vunpack.c.h.b16 %v1423
    %v1566 = vpack.c.b16 %v1560, %v1560
    %v1567 = vpack.c.b16 %v1561, %v1561
    %v1568 = vpack.c.b16 %v1562, %v1562
    %v1569 = vpack.c.b16 %v1563, %v1563
    %v1570 = vpack.c.b16 %v1564, %v1564
    %v1571 = vpack.c.b16 %v1565, %v1565
    %1572 = vrot.lane.b32.xlu0 %v1566, 126
    %v1573 = vpop.permute.xlu0 %1572
    %1574 = vrot.lane.b32.xlu0 %v1567, 126
    %v1575 = vpop.permute.xlu0 %1574
    %1576 = vrot.lane.b32.xlu0 %v1568, 126
    %v1577 = vpop.permute.xlu0 %1576
    %1578 = vrot.lane.b32.xlu0 %v1569, 126
    %v1579 = vpop.permute.xlu0 %1578
    %1580 = vrot.lane.b32.xlu0 %v1570, 126
    %v1581 = vpop.permute.xlu0 %1580
    %1582 = vrot.lane.b32.xlu0 %v1571, 126
    %v1583 = vpop.permute.xlu0 %1582
    %v1584 = vsel %vm584, %v1573, %v1575
    %v1585 = vsel %vm584, %v1575, %v1577
    %v1586 = vsel %vm584, %v1577, %v1579
    %v1587 = vsel %vm584, %v1579, %v1581
    %v1588 = vsel %vm584, %v1581, %v1583
    %v1592 = vunpack.c.l.b16 %v1441
    %v1593 = vunpack.c.h.b16 %v1441
    %v1594 = vunpack.c.l.b16 %v1442
    %v1595 = vunpack.c.h.b16 %v1442
    %v1596 = vunpack.c.l.b16 %v1443
    %v1597 = vunpack.c.h.b16 %v1443
    %v1598 = vpack.c.b16 %v1592, %v1592
    %v1599 = vpack.c.b16 %v1593, %v1593
    %v1600 = vpack.c.b16 %v1594, %v1594
    %v1601 = vpack.c.b16 %v1595, %v1595
    %v1602 = vpack.c.b16 %v1596, %v1596
    %v1603 = vpack.c.b16 %v1597, %v1597
    %1604 = vrot.lane.b32.xlu0 %v1598, 112
    %v1605 = vpop.permute.xlu0 %1604
    %1606 = vrot.lane.b32.xlu0 %v1599, 112
    %v1607 = vpop.permute.xlu0 %1606
    %1608 = vrot.lane.b32.xlu0 %v1600, 112
    %v1609 = vpop.permute.xlu0 %1608
    %1610 = vrot.lane.b32.xlu0 %v1601, 112
    %v1611 = vpop.permute.xlu0 %1610
    %1612 = vrot.lane.b32.xlu0 %v1602, 112
    %v1613 = vpop.permute.xlu0 %1612
    %1614 = vrot.lane.b32.xlu0 %v1603, 112
    %v1615 = vpop.permute.xlu0 %1614
    %v1616 = vsel %vm630, %v1605, %v1607
    %v1617 = vsel %vm630, %v1607, %v1609
    %v1618 = vsel %vm630, %v1609, %v1611
    %v1619 = vsel %vm630, %v1611, %v1613
    %v1620 = vsel %vm630, %v1613, %v1615
    %v1624 = vunpack.c.l.b16 %v1444
    %v1625 = vunpack.c.h.b16 %v1444
    %v1626 = vunpack.c.l.b16 %v1445
    %v1627 = vunpack.c.h.b16 %v1445
    %v1628 = vunpack.c.l.b16 %v1446
    %v1629 = vpack.c.b16 %v1624, %v1624
    %v1630 = vpack.c.b16 %v1625, %v1625
    %v1631 = vpack.c.b16 %v1626, %v1626
    %v1632 = vpack.c.b16 %v1627, %v1627
    %v1633 = vpack.c.b16 %v1628, %v1628
    %1634 = vrot.lane.b32.xlu0 %v1629, 111
    %v1635 = vpop.permute.xlu0 %1634
    %1636 = vrot.lane.b32.xlu0 %v1630, 111
    %v1637 = vpop.permute.xlu0 %1636
    %1638 = vrot.lane.b32.xlu0 %v1631, 111
    %v1639 = vpop.permute.xlu0 %1638
    %1640 = vrot.lane.b32.xlu0 %v1632, 111
    %v1641 = vpop.permute.xlu0 %1640
    %1642 = vrot.lane.b32.xlu0 %v1633, 111
    %v1643 = vpop.permute.xlu0 %1642
    %v1644 = vsel %vm361, %v1635, %v1637
    %v1645 = vsel %vm361, %v1637, %v1639
    %v1646 = vsel %vm361, %v1639, %v1641
    %v1647 = vsel %vm361, %v1641, %v1643
    %v1651 = vunpack.c.l.b16 %v1467
    %v1652 = vunpack.c.h.b16 %v1467
    %v1653 = vunpack.c.l.b16 %v1468
    %v1654 = vunpack.c.h.b16 %v1468
    %v1655 = vunpack.c.l.b16 %v1469
    %v1656 = vunpack.c.h.b16 %v1469
    %v1657 = vpack.c.b16 %v1651, %v1651
    %v1658 = vpack.c.b16 %v1652, %v1652
    %v1659 = vpack.c.b16 %v1653, %v1653
    %v1660 = vpack.c.b16 %v1654, %v1654
    %v1661 = vpack.c.b16 %v1655, %v1655
    %v1662 = vpack.c.b16 %v1656, %v1656
    %1663 = vrot.lane.b32.xlu0 %v1657, 110
    %v1664 = vpop.permute.xlu0 %1663
    %1665 = vrot.lane.b32.xlu0 %v1658, 110
    %v1666 = vpop.permute.xlu0 %1665
    %1667 = vrot.lane.b32.xlu0 %v1659, 110
    %v1668 = vpop.permute.xlu0 %1667
    %1669 = vrot.lane.b32.xlu0 %v1660, 110
    %v1670 = vpop.permute.xlu0 %1669
    %1671 = vrot.lane.b32.xlu0 %v1661, 110
    %v1672 = vpop.permute.xlu0 %1671
    %1673 = vrot.lane.b32.xlu0 %v1662, 110
    %v1674 = vpop.permute.xlu0 %1673
    %v1675 = vsel %vm716, %v1664, %v1666
    %v1676 = vsel %vm716, %v1666, %v1668
    %v1677 = vsel %vm716, %v1668, %v1670
    %v1678 = vsel %vm716, %v1670, %v1672
    %v1679 = vsel %vm716, %v1672, %v1674
    %v1683 = vunpack.c.l.b16 %v1487
    %v1684 = vunpack.c.h.b16 %v1487
    %v1685 = vunpack.c.l.b16 %v1488
    %v1686 = vunpack.c.h.b16 %v1488
    %v1687 = vunpack.c.l.b16 %v1489
    %v1688 = vunpack.c.h.b16 %v1489
    %v1689 = vpack.c.b16 %v1683, %v1683
    %v1690 = vpack.c.b16 %v1684, %v1684
    %v1691 = vpack.c.b16 %v1685, %v1685
    %v1692 = vpack.c.b16 %v1686, %v1686
    %v1693 = vpack.c.b16 %v1687, %v1687
    %v1694 = vpack.c.b16 %v1688, %v1688
    %1695 = vrot.lane.b32.xlu0 %v1689, 96
    %v1696 = vpop.permute.xlu0 %1695
    %1697 = vrot.lane.b32.xlu0 %v1690, 96
    %v1698 = vpop.permute.xlu0 %1697
    %1699 = vrot.lane.b32.xlu0 %v1691, 96
    %v1700 = vpop.permute.xlu0 %1699
    %1701 = vrot.lane.b32.xlu0 %v1692, 96
    %v1702 = vpop.permute.xlu0 %1701
    %1703 = vrot.lane.b32.xlu0 %v1693, 96
    %v1704 = vpop.permute.xlu0 %1703
    %1705 = vrot.lane.b32.xlu0 %v1694, 96
    %v1706 = vpop.permute.xlu0 %1705
    %v1707 = vsel %vm761, %v1696, %v1698
    %v1708 = vsel %vm761, %v1698, %v1700
    %v1709 = vsel %vm761, %v1700, %v1702
    %v1710 = vsel %vm761, %v1702, %v1704
    %v1711 = vsel %vm761, %v1704, %v1706
    %v1715 = vunpack.c.l.b16 %v1447
    %v1716 = vunpack.c.h.b16 %v1447
    %v1717 = vunpack.c.l.b16 %v1448
    %v1718 = vunpack.c.h.b16 %v1448
    %v1719 = vunpack.c.l.b16 %v1449
    %v1720 = vunpack.c.h.b16 %v1449
    %v1721 = vpack.c.b16 %v1715, %v1715
    %v1722 = vpack.c.b16 %v1716, %v1716
    %v1723 = vpack.c.b16 %v1717, %v1717
    %v1724 = vpack.c.b16 %v1718, %v1718
    %v1725 = vpack.c.b16 %v1719, %v1719
    %v1726 = vpack.c.b16 %v1720, %v1720
    %1727 = vrot.lane.b32.xlu0 %v1721, 95
    %v1728 = vpop.permute.xlu0 %1727
    %1729 = vrot.lane.b32.xlu0 %v1722, 95
    %v1730 = vpop.permute.xlu0 %1729
    %1731 = vrot.lane.b32.xlu0 %v1723, 95
    %v1732 = vpop.permute.xlu0 %1731
    %1733 = vrot.lane.b32.xlu0 %v1724, 95
    %v1734 = vpop.permute.xlu0 %1733
    %1735 = vrot.lane.b32.xlu0 %v1725, 95
    %v1736 = vpop.permute.xlu0 %1735
    %1737 = vrot.lane.b32.xlu0 %v1726, 95
    %v1738 = vpop.permute.xlu0 %1737
    %v1739 = vsel %vm807, %v1728, %v1730
    %v1740 = vsel %vm807, %v1730, %v1732
    %v1741 = vsel %vm807, %v1732, %v1734
    %v1742 = vsel %vm807, %v1734, %v1736
    %v1743 = vsel %vm807, %v1736, %v1738
    %v1747 = vunpack.c.l.b16 %v1507
    %v1748 = vunpack.c.h.b16 %v1507
    %v1749 = vunpack.c.l.b16 %v1508
    %v1750 = vunpack.c.h.b16 %v1508
    %v1751 = vunpack.c.l.b16 %v1509
    %v1752 = vunpack.c.h.b16 %v1509
    %v1753 = vpack.c.b16 %v1747, %v1747
    %v1754 = vpack.c.b16 %v1748, %v1748
    %v1755 = vpack.c.b16 %v1749, %v1749
    %v1756 = vpack.c.b16 %v1750, %v1750
    %v1757 = vpack.c.b16 %v1751, %v1751
    %v1758 = vpack.c.b16 %v1752, %v1752
    %1759 = vrot.lane.b32.xlu0 %v1753, 94
    %v1760 = vpop.permute.xlu0 %1759
    %1761 = vrot.lane.b32.xlu0 %v1754, 94
    %v1762 = vpop.permute.xlu0 %1761
    %1763 = vrot.lane.b32.xlu0 %v1755, 94
    %v1764 = vpop.permute.xlu0 %1763
    %1765 = vrot.lane.b32.xlu0 %v1756, 94
    %v1766 = vpop.permute.xlu0 %1765
    %1767 = vrot.lane.b32.xlu0 %v1757, 94
    %v1768 = vpop.permute.xlu0 %1767
    %1769 = vrot.lane.b32.xlu0 %v1758, 94
    %v1770 = vpop.permute.xlu0 %1769
    %v1771 = vsel %vm852, %v1760, %v1762
    %v1772 = vsel %vm852, %v1762, %v1764
    %v1773 = vsel %vm852, %v1764, %v1766
    %v1774 = vsel %vm852, %v1766, %v1768
    %v1775 = vsel %vm852, %v1768, %v1770
    %v1778 = vsel %vm877, %v1519, %v1552
    %v1781 = vsel %vm877, %v1520, %v1553
    %v1784 = vsel %vm877, %v1521, %v1554
    %v1787 = vsel %vm877, %v1522, %v1555
    %v1790 = vsel %vm877, %v1523, %v1556
    %v1793 = vsel %vm877, %v1524, %v1551
    %v1796 = vsel %vm877, %v1584, %v1616
    %v1799 = vsel %vm877, %v1585, %v1617
    %v1802 = vsel %vm877, %v1586, %v1618
    %v1805 = vsel %vm877, %v1587, %v1619
    %v1808 = vsel %vm877, %v1588, %v1620
    %v1811 = vsel %vm877, %v1583, %v1615
    %v1814 = vsel %vm877, %v1635, %v1664
    %v1817 = vsel %vm877, %v1644, %v1675
    %v1820 = vsel %vm877, %v1645, %v1676
    %v1823 = vsel %vm877, %v1646, %v1677
    %v1826 = vsel %vm877, %v1647, %v1678
    %v1829 = vsel %vm877, %v1643, %v1679
    %v1832 = vsel %vm877, %v1696, %v1728
    %v1835 = vsel %vm877, %v1707, %v1739
    %v1838 = vsel %vm877, %v1708, %v1740
    %v1841 = vsel %vm877, %v1709, %v1741
    %v1844 = vsel %vm877, %v1710, %v1742
    %v1847 = vsel %vm877, %v1711, %v1743
    %v1848 = vld [vmem:[%s3] sm:$0xf]
    %1873 = vrot.lane.b32.xlu0 %v1778, 17
    %v1874 = vpop.permute.xlu0 %1873
    %1875 = vrot.lane.b32.xlu0 %v1781, 17
    %v1876 = vpop.permute.xlu0 %1875
    %1877 = vrot.lane.b32.xlu0 %v1784, 17
    %v1878 = vpop.permute.xlu0 %1877
    %1879 = vrot.lane.b32.xlu0 %v1787, 17
    %v1880 = vpop.permute.xlu0 %1879
    %1881 = vrot.lane.b32.xlu0 %v1790, 17
    %v1882 = vpop.permute.xlu0 %1881
    %1883 = vrot.lane.b32.xlu0 %v1793, 17
    %v1884 = vpop.permute.xlu0 %1883
    %1885 = vrot.lane.b32.xlu0 %v1796, 17
    %v1886 = vpop.permute.xlu0 %1885
    %1887 = vrot.lane.b32.xlu0 %v1799, 17
    %v1888 = vpop.permute.xlu0 %1887
    %1889 = vrot.lane.b32.xlu0 %v1802, 17
    %v1890 = vpop.permute.xlu0 %1889
    %1891 = vrot.lane.b32.xlu0 %v1805, 17
    %v1892 = vpop.permute.xlu0 %1891
    %1893 = vrot.lane.b32.xlu0 %v1808, 17
    %v1894 = vpop.permute.xlu0 %1893
    %1895 = vrot.lane.b32.xlu0 %v1811, 17
    %v1896 = vpop.permute.xlu0 %1895
    %1897 = vrot.lane.b32.xlu0 %v1814, 17
    %v1898 = vpop.permute.xlu0 %1897
    %1899 = vrot.lane.b32.xlu0 %v1817, 17
    %v1900 = vpop.permute.xlu0 %1899
    %1901 = vrot.lane.b32.xlu0 %v1820, 17
    %v1902 = vpop.permute.xlu0 %1901
    %1903 = vrot.lane.b32.xlu0 %v1823, 17
    %v1904 = vpop.permute.xlu0 %1903
    %1905 = vrot.lane.b32.xlu0 %v1826, 17
    %v1906 = vpop.permute.xlu0 %1905
    %1907 = vrot.lane.b32.xlu0 %v1829, 17
    %v1908 = vpop.permute.xlu0 %1907
    %1909 = vrot.lane.b32.xlu0 %v1832, 17
    %v1910 = vpop.permute.xlu0 %1909
    %1911 = vrot.lane.b32.xlu0 %v1835, 17
    %v1912 = vpop.permute.xlu0 %1911
    %1913 = vrot.lane.b32.xlu0 %v1838, 17
    %v1914 = vpop.permute.xlu0 %1913
    %1915 = vrot.lane.b32.xlu0 %v1841, 17
    %v1916 = vpop.permute.xlu0 %1915
    %1917 = vrot.lane.b32.xlu0 %v1844, 17
    %v1918 = vpop.permute.xlu0 %1917
    %1919 = vrot.lane.b32.xlu0 %v1847, 17
    %v1920 = vpop.permute.xlu0 %1919
    %1921 = vrot.lane.b32.xlu0 %v1760, 17
    %v1922 = vpop.permute.xlu0 %1921
    %1923 = vrot.lane.b32.xlu0 %v1771, 17
    %v1924 = vpop.permute.xlu0 %1923
    %1925 = vrot.lane.b32.xlu0 %v1772, 17
    %v1926 = vpop.permute.xlu0 %1925
    %1927 = vrot.lane.b32.xlu0 %v1773, 17
    %v1928 = vpop.permute.xlu0 %1927
    %1929 = vrot.lane.b32.xlu0 %v1774, 17
    %v1930 = vpop.permute.xlu0 %1929
    %1931 = vrot.lane.b32.xlu0 %v1775, 17
    %v1932 = vpop.permute.xlu0 %1931
    %v1933 = vsel %vm465, %v1874, %v1876
    %v1934 = vsel %vm465, %v1876, %v1878
    %v1935 = vsel %vm465, %v1878, %v1880
    %v1936 = vsel %vm465, %v1880, %v1882
    %v1937 = vsel %vm465, %v1882, %v1884
    %v1938 = vsel %vm465, %v1886, %v1888
    %v1939 = vsel %vm465, %v1888, %v1890
    %v1940 = vsel %vm465, %v1890, %v1892
    %v1941 = vsel %vm465, %v1892, %v1894
    %v1942 = vsel %vm465, %v1894, %v1896
    %v1943 = vsel %vm465, %v1898, %v1900
    %v1944 = vsel %vm465, %v1900, %v1902
    %v1945 = vsel %vm465, %v1902, %v1904
    %v1946 = vsel %vm465, %v1904, %v1906
    %v1947 = vsel %vm465, %v1906, %v1908
    %v1948 = vsel %vm465, %v1910, %v1912
    %v1949 = vsel %vm465, %v1912, %v1914
    %v1950 = vsel %vm465, %v1914, %v1916
    %v1951 = vsel %vm465, %v1916, %v1918
    %v1952 = vsel %vm465, %v1918, %v1920
    %v1953 = vsel %vm465, %v1922, %v1924
    %v1954 = vsel %vm465, %v1924, %v1926
    %v1955 = vsel %vm465, %v1926, %v1928
    %v1956 = vsel %vm465, %v1928, %v1930
    %v1957 = vsel %vm465, %v1930, %v1932
    %vm1978 = vcmask 588800
    %v1980 = vsel %vm1978, %v1848, 0
    %v1983 = vsel %vm877, %v1953, 0
    %v1986 = vsel %vm877, %v1954, 0
    %v1989 = vsel %vm877, %v1955, 0
    %v1992 = vsel %vm877, %v1956, 0
    %v1995 = vsel %vm877, %v1957, 0
    %1997 = vmatprep.subr.bf16.mxu0 0
    %1998 = vmatpush1.bf16.msra.mxu0 0
    %1999 = vmatprep.subr.bf16.mxu0 0
    %2000 = vmatpush1.bf16.msra.mxu0 0
    %2001 = vmatprep.subr.bf16.mxu0 0
    %2002 = vmatpush1.bf16.msra.mxu0 0
    %2003 = vmatprep.subr.bf16.mxu0 %v1986
    %2004 = vmatpush1.bf16.msra.mxu0 %v1983
    %2005 = vmatprep.subr.bf16.mxu0 %v1949
    %2006 = vmatpush1.bf16.msra.mxu0 %v1948
    %2007 = vmatprep.subr.bf16.mxu0 %v1944
    %2008 = vmatpush1.bf16.msra.mxu0 %v1943
    %2009 = vmatprep.subr.bf16.mxu0 %v1939
    %2010 = vmatpush1.bf16.msra.mxu0 %v1938
    %2011 = vmatprep.subr.bf16.mxu0 %v1934
    %2012 = vmatpush1.bf16.msra.mxu0 %v1933
    %2013 = vmatprep.subr.bf16.mxu0 0
    %2014 = vmatpush2.bf16.msra.mxu0 0
    %2015 = vmatprep.subr.bf16.mxu0 0
    %2016 = vmatpush2.bf16.msra.mxu0 0
    %2017 = vmatprep.subr.bf16.mxu0 0
    %2018 = vmatpush2.bf16.msra.mxu0 0
    %2019 = vmatprep.subr.bf16.mxu0 0
    %2020 = vmatpush2.bf16.msra.mxu0 0
    %2021 = vmatprep.subr.bf16.mxu0 0
    %2022 = vmatpush2.bf16.msra.mxu0 0
    %2023 = vmatprep.subr.bf16.mxu0 0
    %2024 = vmatpush2.bf16.msra.mxu0 0
    %2025 = vmatprep.subr.bf16.mxu0 0
    %2026 = vmatpush2.bf16.msra.mxu0 0
    %2027 = vmatprep.subr.bf16.mxu0 0
    %2028 = vmatpush2.bf16.msra.mxu0 0
    %2029 = vmatprep.mubr.bf16.mxu0 0
    %2030 = vmatmul.mubr.bf16.gmra.mxu0 %v1980
    %v2031 = vpop.f32.mrf.mxu0
    %v2032 = vadd.f32 %v1278, %v2031
    %v2033 = vpop.f32.mrf.mxu0
    %v2034 = vadd.f32 %v1280, %v2033
    %v2035 = vpop.f32.mrf.mxu0
    %v2036 = vpop.f32.mrf.mxu0
    %2037 = vdwg.mxu0
    %2038 = vmatprep.subr.bf16.mxu0 0
    %2039 = vmatpush1.bf16.msra.mxu0 0
    %2040 = vmatprep.subr.bf16.mxu0 0
    %2041 = vmatpush1.bf16.msra.mxu0 0
    %2042 = vmatprep.subr.bf16.mxu0 0
    %2043 = vmatpush1.bf16.msra.mxu0 0
    %2044 = vmatprep.subr.bf16.mxu0 %v1992
    %2045 = vmatpush1.bf16.msra.mxu0 %v1989
    %2046 = vmatprep.subr.bf16.mxu0 %v1951
    %2047 = vmatpush1.bf16.msra.mxu0 %v1950
    %2048 = vmatprep.subr.bf16.mxu0 %v1946
    %2049 = vmatpush1.bf16.msra.mxu0 %v1945
    %2050 = vmatprep.subr.bf16.mxu0 %v1941
    %2051 = vmatpush1.bf16.msra.mxu0 %v1940
    %2052 = vmatprep.subr.bf16.mxu0 %v1936
    %2053 = vmatpush1.bf16.msra.mxu0 %v1935
    %2054 = vmatprep.subr.bf16.mxu0 0
    %2055 = vmatpush2.bf16.msra.mxu0 0
    %2056 = vmatprep.subr.bf16.mxu0 0
    %2057 = vmatpush2.bf16.msra.mxu0 0
    %2058 = vmatprep.subr.bf16.mxu0 0
    %2059 = vmatpush2.bf16.msra.mxu0 0
    %2060 = vmatprep.subr.bf16.mxu0 0
    %2061 = vmatpush2.bf16.msra.mxu0 0
    %2062 = vmatprep.subr.bf16.mxu0 0
    %2063 = vmatpush2.bf16.msra.mxu0 0
    %2064 = vmatprep.subr.bf16.mxu0 0
    %2065 = vmatpush2.bf16.msra.mxu0 0
    %2066 = vmatprep.subr.bf16.mxu0 0
    %2067 = vmatpush2.bf16.msra.mxu0 0
    %2068 = vmatprep.subr.bf16.mxu0 0
    %2069 = vmatpush2.bf16.msra.mxu0 0
    %2070 = vmatprep.mubr.bf16.mxu0 0
    %2071 = vmatmul.mubr.bf16.gmra.mxu0 %v1980
    %v2072 = vpop.f32.mrf.mxu0
    %v2073 = vpop.f32.mrf.mxu0
    %v2074 = vadd.f32 %v1320, %v2073
    %v2075 = vpop.f32.mrf.mxu0
    %v2076 = vpop.f32.mrf.mxu0
    %2077 = vdwg.mxu0
    %2078 = vmatprep.subr.bf16.mxu0 0
    %2079 = vmatpush1.bf16.msra.mxu0 0
    %2080 = vmatprep.subr.bf16.mxu0 0
    %2081 = vmatpush1.bf16.msra.mxu0 0
    %2082 = vmatprep.subr.bf16.mxu0 0
    %2083 = vmatpush1.bf16.msra.mxu0 0
    %2084 = vmatprep.subr.bf16.mxu0 0
    %2085 = vmatpush1.bf16.msra.mxu0 %v1995
    %2086 = vmatprep.subr.bf16.mxu0 0
    %2087 = vmatpush1.bf16.msra.mxu0 %v1952
    %2088 = vmatprep.subr.bf16.mxu0 0
    %2089 = vmatpush1.bf16.msra.mxu0 %v1947
    %2090 = vmatprep.subr.bf16.mxu0 0
    %2091 = vmatpush1.bf16.msra.mxu0 %v1942
    %2092 = vmatprep.subr.bf16.mxu0 0
    %2093 = vmatpush1.bf16.msra.mxu0 %v1937
    %2094 = vmatprep.subr.bf16.mxu0 0
    %2095 = vmatpush2.bf16.msra.mxu0 0
    %2096 = vmatprep.subr.bf16.mxu0 0
    %2097 = vmatpush2.bf16.msra.mxu0 0
    %2098 = vmatprep.subr.bf16.mxu0 0
    %2099 = vmatpush2.bf16.msra.mxu0 0
    %2100 = vmatprep.subr.bf16.mxu0 0
    %2101 = vmatpush2.bf16.msra.mxu0 0
    %2102 = vmatprep.subr.bf16.mxu0 0
    %2103 = vmatpush2.bf16.msra.mxu0 0
    %2104 = vmatprep.subr.bf16.mxu0 0
    %2105 = vmatpush2.bf16.msra.mxu0 0
    %2106 = vmatprep.subr.bf16.mxu0 0
    %2107 = vmatpush2.bf16.msra.mxu0 0
    %2108 = vmatprep.subr.bf16.mxu0 0
    %2109 = vmatpush2.bf16.msra.mxu0 0
    %2110 = vmatprep.mubr.bf16.mxu0 0
    %2111 = vmatmul.mubr.bf16.gmra.mxu0 %v1980
    %v2112 = vpop.f32.mrf.mxu0
    %v2113 = vadd.f32 %v1359, %v2112
    %v2114 = vpop.f32.mrf.mxu0
    %v2115 = vpop.f32.mrf.mxu0
    %v2116 = vpop.f32.mrf.mxu0
    %2117 = vdwg.mxu0
    %v2118 = vld [vmem:[%s4] sm:$0xff]
    %2120 = vset.pattern.permute.xlu0 0
    %2121 = vperm.xlu0 %2120, %v2118
    %v2122 = vpop.permute.xlu0 %2121
    %v2124 = vadd.f32 %v2032, %v2122
    %v2125 = vadd.f32 %v2034, %v2122
    %v2126 = vadd.f32 %v2074, %v2122
    %v2127 = vadd.f32 %v2113, %v2122
    %vm2128 = vcmp.ge.f32.partialorder %v2124, 0.0
    %vm2129 = vcmp.ge.f32.partialorder %v2125, 0.0
    %vm2130 = vcmp.ge.f32.partialorder %v2126, 0.0
    %vm2131 = vcmp.ge.f32.partialorder %v2127, 0.0
    %v2132 = vmul.f32 %v2124, 0.01
    %v2133 = vmul.f32 %v2125, 0.01
    %v2134 = vmul.f32 %v2126, 0.01
    %v2135 = vmul.f32 %v2127, 0.01
    %v2136 = vsel %vm2128, %v2124, %v2132
    %v2137 = vsel %vm2129, %v2125, %v2133
    %v2138 = vsel %vm2130, %v2126, %v2134
    %v2139 = vsel %vm2131, %v2127, %v2135
    %2140 = vst [vmem:[#allocation5] sm:$0xff] %v2136
    %2141 = vst [vmem:[#allocation5 + $0x8] sm:$0xff] %v2137
    %s2142 = scalar_lea.vmem [#allocation5], 16
    %2143 = vst [vmem:[%s2142] sm:$0xff] %v2138
    %2144 = vst [vmem:[%s2142 + $0x8] sm:$0xff] %v2139
    // Predicated region
    $region82: #{tpu_custom_call.1} parent=1 // pred_check
      _
    $region83: #{tpu_custom_call.1} parent=1 // pred_check_branch
      %2146 = sbr.rel (0) target = $region85
    $region84: #{tpu_custom_call.1} parent=1 // pred_region
      %s2148 = ssub.s32 512, 512
      %2149 = vsyncadd [#allocation6], %s2148
      %s2150 = sshll.u32 [#allocation5], 4
      %s2151 = int_to_ptr.vmem [resolvable:$true] %s2150
      %2156 = dma.vmem_to_hbm [thread:$0]  %s2151, 512, %s6, [#allocation6], 256, 256, 16
    $region85: #{tpu_custom_call.1} parent=1 // pred_fallthru
      _
    // Predicated region
    $region86: #{tpu_custom_call.1} parent=1 // pred_check
      _
    $region87: #{tpu_custom_call.1} parent=1 // pred_check_branch
      %2158 = sbr.rel (0) target = $region89
    $region88: #{tpu_custom_call.1} parent=1 // pred_region
      %2159 = dma.done [#allocation6], 512
    $region89: #{tpu_custom_call.1} parent=1 // pred_fallthru
      _
    %2160 = vsyncpa [#allocation6], 1
  %2161 = vsyncmov [#allocation4]
  %s2162 = vpop.sfrf %2161
  %p2163 = scmp.eq.s32.totalorder %s2162, 0
  %p2164 = pneg %p2163
  %2166 = shalt.err (%p2164)
  %s2167 = scalar_lea.sflag [#allocation4], 1
  %2168 = vsyncmov %s2167
  %s2169 = vpop.sfrf %2168
  %p2170 = scmp.eq.s32.totalorder %s2169, 0
  %p2171 = pneg %p2170
  %2173 = shalt.err (%p2171)

</llo_original>
